<compile_context>
chip_gen: v7x
topology: tpu7x:2x2x1
jax: 0.10.0
libtpu: 0.0.40
codegen_flags: <defaults>
</compile_context>

<pallas_src>
import jax
import jax.numpy as jnp
from jax.experimental import pallas as pl
from jax.experimental.pallas import tpu as pltpu

NODE_IN_DIM = 16
HIDDEN = 32
NUM_LAYERS = 6
NUM_ATOM_TYPES = 5
BN_EPS = 1e-5

LANES = 128
H2 = 2 * HIDDEN          # 64
H4 = 4 * HIDDEN          # 128 (fused head layer-1 width == LANES)

# ---- packed weight-slab layout (bf16, [W_ROWS, 128]); all offsets multiples of 16 ----
WE_R0 = 0                                   # node_embedding        [16, 32]
WG_R0 = WE_R0 + NODE_IN_DIM                 # 6 x GCN weights       [32, 32] each
WH1_R0 = WG_R0 + NUM_LAYERS * HIDDEN        # fused head L1         [32, 128]
WH2_R0 = WH1_R0 + HIDDEN                    # fused head L2         [128, 64] block-diag
WH3_R0 = WH2_R0 + H4                        # fused head L3         [64, 128] block-diag, lane-padded
W_ROWS = WH3_R0 + H2                        # 432

# ---- packed scale/shift-slab layout (f32, [S_ROWS, 128]) ----
SE_ROW, TE_ROW = 0, 1
SG_ROW0, TG_ROW0 = 2, 2 + NUM_LAYERS        # rows 2..7 / 8..13
SH1_ROW, TH1_ROW = 14, 15
SH2_ROW, TH2_ROW = 16, 17
BH3_ROW = 18
S_ROWS = 24

ATOM_LANE0 = 0    # atom logits live in output lanes [0, 5)
POS_LANE0 = 8     # position offsets live in output lanes [8, 11)


def _silu(v):
    return v * jax.nn.sigmoid(v)


# ----------------------------------------------------------------------------
# Pallas kernel: entire forward pass, fully VMEM-resident (tiny graph).
# ----------------------------------------------------------------------------
def simple_model_kernel(x_ref, a_ref, w_ref, s_ref, out_ref):
    x = x_ref[...]                                  # [N, 16] f32
    a_bf = a_ref[...].astype(jnp.bfloat16)          # [N, N]
    s = s_ref[...]                                  # [24, 128] f32

    def bn_silu(z, s_row, t_row, width):
        # eval-mode BN folded to per-channel scale/shift, then SiLU (f32 path)
        return _silu(z * s[s_row:s_row + 1, :width] + s[t_row:t_row + 1, :width])

    # node embedding -> BN -> SiLU
    we = w_ref[WE_R0:WE_R0 + NODE_IN_DIM, :HIDDEN]
    h = jnp.dot(x.astype(jnp.bfloat16), we, preferred_element_type=jnp.float32)
    h = bn_silu(h, SE_ROW, TE_ROW, HIDDEN)

    # GCN stack: h <- SiLU(BN(A_norm @ (h @ W) + b)) (+ residual for i > 0)
    for i in range(NUM_LAYERS):
        h_res = h
        r0 = WG_R0 + i * HIDDEN
        wg = w_ref[r0:r0 + HIDDEN, :HIDDEN]
        z = jnp.dot(h.astype(jnp.bfloat16), wg, preferred_element_type=jnp.float32)
        z = jnp.dot(a_bf, z.astype(jnp.bfloat16), preferred_element_type=jnp.float32)
        z = bn_silu(z, SG_ROW0 + i, TG_ROW0 + i, HIDDEN)
        h = z + h_res if i > 0 else z

    # fused atom-type + position heads (3 matmuls instead of 6)
    wh1 = w_ref[WH1_R0:WH1_R0 + HIDDEN, :]                       # [32, 128]
    t = jnp.dot(h.astype(jnp.bfloat16), wh1, preferred_element_type=jnp.float32)
    t = bn_silu(t, SH1_ROW, TH1_ROW, LANES)

    wh2 = w_ref[WH2_R0:WH2_R0 + H4, :H2]                         # [128, 64]
    u = jnp.dot(t.astype(jnp.bfloat16), wh2, preferred_element_type=jnp.float32)
    u = bn_silu(u, SH2_ROW, TH2_ROW, H2)

    wh3 = w_ref[WH3_R0:WH3_R0 + H2, :]                           # [64, 128]
    out = jnp.dot(u.astype(jnp.bfloat16), wh3, preferred_element_type=jnp.float32)
    out = out + s[BH3_ROW:BH3_ROW + 1, :]

    out_ref[...] = out.astype(out_ref.dtype)                     # lane-dense full store


def simple_model_forward(x, a_norm, w_slab, s_slab):
    n = x.shape[0]
    flops = (2 * n * NODE_IN_DIM * HIDDEN
             + NUM_LAYERS * (2 * n * HIDDEN * HIDDEN + 2 * n * n * HIDDEN)
             + 2 * n * HIDDEN * H4 + 2 * n * H4 * H2 + 2 * n * H2 * LANES)
    transcendentals = n * (HIDDEN * (1 + NUM_LAYERS) + H4 + H2)
    bytes_accessed = (x.size * 4 + a_norm.size * 4 + w_slab.size * 2
                      + s_slab.size * 4 + n * LANES * 4)

    out = pl.pallas_call(
        simple_model_kernel,
        out_shape=jax.ShapeDtypeStruct((n, LANES), jnp.float32),
        in_specs=[pl.BlockSpec(memory_space=pltpu.MemorySpace.VMEM)] * 4,
        out_specs=pl.BlockSpec(memory_space=pltpu.MemorySpace.VMEM),
        cost_estimate=pl.CostEstimate(
            flops=int(flops),
            transcendentals=int(transcendentals),
            bytes_accessed=int(bytes_accessed)),
    )(x, a_norm, w_slab, s_slab)

    atom = out[:, ATOM_LANE0:ATOM_LANE0 + NUM_ATOM_TYPES]
    pos = out[:, POS_LANE0:POS_LANE0 + 3]
    return atom, pos


# ----------------------------------------------------------------------------
# Glue: parameter init, slab packing, GCN adjacency normalization, JAX reference
# ----------------------------------------------------------------------------
def _linear(key, din, dout):
    k1, k2 = jax.random.split(key)
    bound = 1.0 / jnp.sqrt(jnp.float32(din))
    w = jax.random.uniform(k1, (din, dout), jnp.float32, -bound, bound)
    b = jax.random.uniform(k2, (dout,), jnp.float32, -bound, bound)
    return w, b


def _bn_affine(key, dim):
    # eval-mode BatchNorm1d folded into per-channel scale/shift
    k1, k2, k3, k4 = jax.random.split(key, 4)
    gamma = jax.random.uniform(k1, (dim,), jnp.float32, 0.8, 1.2)
    beta = 0.1 * jax.random.normal(k2, (dim,), jnp.float32)
    mean = 0.1 * jax.random.normal(k3, (dim,), jnp.float32)
    var = jax.random.uniform(k4, (dim,), jnp.float32, 0.5, 1.5)
    s = gamma / jnp.sqrt(var + BN_EPS)
    t = beta - mean * s
    return s, t


def init_params(key):
    keys = iter(jax.random.split(key, 32))

    we, be = _linear(next(keys), NODE_IN_DIM, HIDDEN)
    se, te = _bn_affine(next(keys), HIDDEN)
    te = be * se + te                                 # fold Linear bias into BN shift

    wg, sg, tg = [], [], []
    for _ in range(NUM_LAYERS):
        w, b = _linear(next(keys), HIDDEN, HIDDEN)
        s, t = _bn_affine(next(keys), HIDDEN)
        wg.append(w)
        sg.append(s)
        tg.append(b * s + t)

    def head(out_dim):
        w1, b1 = _linear(next(keys), HIDDEN, H2)
        s1, t1 = _bn_affine(next(keys), H2)
        t1 = b1 * s1 + t1
        w2, b2 = _linear(next(keys), H2, HIDDEN)
        s2, t2 = _bn_affine(next(keys), HIDDEN)
        t2 = b2 * s2 + t2
        w3, b3 = _linear(next(keys), HIDDEN, out_dim)
        return dict(w1=w1, s1=s1, t1=t1, w2=w2, s2=s2, t2=t2, w3=w3, b3=b3)

    return dict(we=we, se=se, te=te, wg=wg, sg=sg, tg=tg,
                atom=head(NUM_ATOM_TYPES), pos=head(3))


def pack_params(p):
    """Pack all parameters into one bf16 weight slab + one f32 scale/shift slab."""
    ah, ph = p["atom"], p["pos"]

    w = jnp.zeros((W_ROWS, LANES), jnp.float32)
    w = w.at[WE_R0:WE_R0 + NODE_IN_DIM, :HIDDEN].set(p["we"])
    for i in range(NUM_LAYERS):
        r0 = WG_R0 + i * HIDDEN
        w = w.at[r0:r0 + HIDDEN, :HIDDEN].set(p["wg"][i])
    # fused head L1: [wa1 | wp1]
    w = w.at[WH1_R0:WH1_R0 + HIDDEN, :H2].set(ah["w1"])
    w = w.at[WH1_R0:WH1_R0 + HIDDEN, H2:H4].set(ph["w1"])
    # fused head L2: block-diag(wa2, wp2)
    w = w.at[WH2_R0:WH2_R0 + H2, :HIDDEN].set(ah["w2"])
    w = w.at[WH2_R0 + H2:WH2_R0 + H4, HIDDEN:H2].set(ph["w2"])
    # fused head L3: block-diag(wa3, wp3), lane-padded to 128 output lanes
    w = w.at[WH3_R0:WH3_R0 + HIDDEN,
             ATOM_LANE0:ATOM_LANE0 + NUM_ATOM_TYPES].set(ah["w3"])
    w = w.at[WH3_R0 + HIDDEN:WH3_R0 + H2, POS_LANE0:POS_LANE0 + 3].set(ph["w3"])

    s = jnp.zeros((S_ROWS, LANES), jnp.float32)
    s = s.at[SE_ROW, :HIDDEN].set(p["se"])
    s = s.at[TE_ROW, :HIDDEN].set(p["te"])
    for i in range(NUM_LAYERS):
        s = s.at[SG_ROW0 + i, :HIDDEN].set(p["sg"][i])
        s = s.at[TG_ROW0 + i, :HIDDEN].set(p["tg"][i])
    s = s.at[SH1_ROW, :H2].set(ah["s1"])
    s = s.at[SH1_ROW, H2:H4].set(ph["s1"])
    s = s.at[TH1_ROW, :H2].set(ah["t1"])
    s = s.at[TH1_ROW, H2:H4].set(ph["t1"])
    s = s.at[SH2_ROW, :HIDDEN].set(ah["s2"])
    s = s.at[SH2_ROW, HIDDEN:H2].set(ph["s2"])
    s = s.at[TH2_ROW, :HIDDEN].set(ah["t2"])
    s = s.at[TH2_ROW, HIDDEN:H2].set(ph["t2"])
    s = s.at[BH3_ROW, ATOM_LANE0:ATOM_LANE0 + NUM_ATOM_TYPES].set(ah["b3"])
    s = s.at[BH3_ROW, POS_LANE0:POS_LANE0 + 3].set(ph["b3"])

    return w.astype(jnp.bfloat16), s


def build_gcn_adj(edge_index, num_nodes):
    # PyG GCNConv normalization: add self-loops, norm = deg^-1/2[src]*deg^-1/2[dst]
    src, dst = edge_index[0], edge_index[1]
    loops = jnp.arange(num_nodes, dtype=src.dtype)
    src = jnp.concatenate([src, loops])
    dst = jnp.concatenate([dst, loops])
    deg = jnp.zeros((num_nodes,), jnp.float32).at[dst].add(1.0)
    dinv = 1.0 / jnp.sqrt(deg)
    norm = dinv[src] * dinv[dst]
    a = jnp.zeros((num_nodes, num_nodes), jnp.float32).at[dst, src].add(norm)
    return a


def reference_forward(x, a, p, weight_dtype=jnp.float32):
    """Pure-JAX reference. weight_dtype=bf16 mirrors the kernel's MXU precision."""
    wd = weight_dtype

    def mm(u, w):
        return jnp.dot(u.astype(wd), jnp.asarray(w).astype(wd),
                       preferred_element_type=jnp.float32)

    h = _silu(mm(x, p["we"]) * p["se"] + p["te"])
    for i in range(NUM_LAYERS):
        z = mm(a, mm(h, p["wg"][i]))
        z = _silu(z * p["sg"][i] + p["tg"][i])
        h = z + h if i > 0 else z

    def run_head(hp):
        t = _silu(mm(h, hp["w1"]) * hp["s1"] + hp["t1"])
        t = _silu(mm(t, hp["w2"]) * hp["s2"] + hp["t2"])
        return mm(t, hp["w3"]) + hp["b3"]

    return run_head(p["atom"]), run_head(p["pos"])


if __name__ == "__main__":
    N = 16  # number of nodes in the (small) graph
    key = jax.random.PRNGKey(0)
    k_x, k_pos, k_p = jax.random.split(key, 3)

    x = jax.random.normal(k_x, (N, NODE_IN_DIM), jnp.float32)
    pos = jax.random.normal(k_pos, (N, 3), jnp.float32)   # unused by forward (as in torch module)

    # simple undirected ring graph, both directions
    idx = jnp.arange(N, dtype=jnp.int32)
    src = jnp.concatenate([idx, (idx + 1) % N])
    dst = jnp.concatenate([(idx + 1) % N, idx])
    edge_index = jnp.stack([src, dst])                     # [2, 2N]

    a_norm = build_gcn_adj(edge_index, N)
    params = init_params(k_p)
    w_slab, s_slab = pack_params(params)

    atom_pred, pos_pred = simple_model_forward(x, a_norm, w_slab, s_slab)
    jax.block_until_ready((atom_pred, pos_pred))

    assert atom_pred.shape == (N, NUM_ATOM_TYPES)
    assert pos_pred.shape == (N, 3)

    def rel_err(got, ref):
        return float(jnp.max(jnp.abs(got - ref)) / (jnp.max(jnp.abs(ref)) + 1e-6))

    # implementation check: reference with identical bf16 weight/MXU rounding
    atom_bf, pos_bf = reference_forward(x, a_norm, params, jnp.bfloat16)
    assert rel_err(atom_pred, atom_bf) < 1e-2, rel_err(atom_pred, atom_bf)
    assert rel_err(pos_pred, pos_bf) < 1e-2, rel_err(pos_pred, pos_bf)

    # fidelity check vs. original full-f32 module semantics (loose: bf16 weights)
    atom_f32, pos_f32 = reference_forward(x, a_norm, params, jnp.float32)
    assert rel_err(atom_pred, atom_f32) < 5e-2, rel_err(atom_pred, atom_f32)
    assert rel_err(pos_pred, pos_f32) < 5e-2, rel_err(pos_pred, pos_f32)

    print("KERNEL_OK")
</pallas_src>

<mosaic_0001>
module attributes {stable_mosaic.version = 11 : i64} {
  func.func @simple_model_kernel(%arg0: memref<16x16xf32, #tpu.memory_space<vmem>>, %arg1: memref<16x16xf32, #tpu.memory_space<vmem>>, %arg2: memref<432x128xbf16, #tpu.memory_space<vmem>>, %arg3: memref<24x128xf32, #tpu.memory_space<vmem>>, %arg4: memref<16x128xf32, #tpu.memory_space<vmem>>) attributes {dimension_semantics = [], scalar_prefetch = 0 : i64, scratch_operands = 0 : i64, tpu.core_type = #tpu.core_type<tc>} {
    %c0 = arith.constant 0 : index
    %c0_0 = arith.constant 0 : index
    %0 = vector.load %arg0[%c0, %c0_0] : memref<16x16xf32, #tpu.memory_space<vmem>>, vector<16x16xf32>
    %c0_1 = arith.constant 0 : index
    %c0_2 = arith.constant 0 : index
    %1 = vector.load %arg1[%c0_1, %c0_2] : memref<16x16xf32, #tpu.memory_space<vmem>>, vector<16x16xf32>
    %2 = arith.truncf %1 : vector<16x16xf32> to vector<16x16xbf16>
    %c0_3 = arith.constant 0 : index
    %c0_4 = arith.constant 0 : index
    %3 = vector.load %arg3[%c0_3, %c0_4] : memref<24x128xf32, #tpu.memory_space<vmem>>, vector<24x128xf32>
    %c0_5 = arith.constant 0 : index
    %c0_6 = arith.constant 0 : index
    %4 = vector.load %arg2[%c0_5, %c0_6] : memref<432x128xbf16, #tpu.memory_space<vmem>>, vector<16x32xbf16>
    %5 = arith.truncf %0 : vector<16x16xf32> to vector<16x16xbf16>
    %cst = arith.constant dense<0.000000e+00> : vector<16x32xf32>
    %6 = tpu.matmul %5, %4, %cst {dimension_numbers = #tpu.dot_dimension_numbers<[1], [0], [0], [1], [0, 0, 1, 1], [], []>} : vector<16x16xbf16>, vector<16x32xbf16>, vector<16x32xf32> -> vector<16x32xf32>
    %7 = vector.extract_strided_slice %3 {offsets = [0, 0], sizes = [1, 32], strides = [1, 1]} : vector<24x128xf32> to vector<1x32xf32>
    %8 = vector.broadcast %7 : vector<1x32xf32> to vector<16x32xf32>
    %9 = arith.mulf %6, %8 : vector<16x32xf32>
    %10 = vector.extract_strided_slice %3 {offsets = [1, 0], sizes = [1, 32], strides = [1, 1]} : vector<24x128xf32> to vector<1x32xf32>
    %11 = vector.broadcast %10 : vector<1x32xf32> to vector<16x32xf32>
    %12 = arith.addf %9, %11 : vector<16x32xf32>
    %13 = arith.negf %12 : vector<16x32xf32>
    %14 = math.exp %13 : vector<16x32xf32>
    %cst_7 = arith.constant 1.000000e+00 : f32
    %15 = vector.broadcast %cst_7 : f32 to vector<16x32xf32>
    %16 = arith.addf %15, %14 : vector<16x32xf32>
    %17 = arith.divf %15, %16 : vector<16x32xf32>
    %18 = arith.mulf %12, %17 : vector<16x32xf32>
    %c16 = arith.constant 16 : index
    %c0_8 = arith.constant 0 : index
    %19 = vector.load %arg2[%c16, %c0_8] : memref<432x128xbf16, #tpu.memory_space<vmem>>, vector<32x32xbf16>
    %20 = arith.truncf %18 : vector<16x32xf32> to vector<16x32xbf16>
    %cst_9 = arith.constant dense<0.000000e+00> : vector<16x32xf32>
    %21 = tpu.matmul %20, %19, %cst_9 {dimension_numbers = #tpu.dot_dimension_numbers<[1], [0], [0], [1], [0, 0, 1, 1], [], []>} : vector<16x32xbf16>, vector<32x32xbf16>, vector<16x32xf32> -> vector<16x32xf32>
    %22 = arith.truncf %21 : vector<16x32xf32> to vector<16x32xbf16>
    %cst_10 = arith.constant dense<0.000000e+00> : vector<16x32xf32>
    %23 = tpu.matmul %2, %22, %cst_10 {dimension_numbers = #tpu.dot_dimension_numbers<[1], [0], [0], [1], [0, 0, 1, 1], [], []>} : vector<16x16xbf16>, vector<16x32xbf16>, vector<16x32xf32> -> vector<16x32xf32>
    %24 = vector.extract_strided_slice %3 {offsets = [2, 0], sizes = [1, 32], strides = [1, 1]} : vector<24x128xf32> to vector<1x32xf32>
    %25 = vector.broadcast %24 : vector<1x32xf32> to vector<16x32xf32>
    %26 = arith.mulf %23, %25 : vector<16x32xf32>
    %27 = vector.extract_strided_slice %3 {offsets = [8, 0], sizes = [1, 32], strides = [1, 1]} : vector<24x128xf32> to vector<1x32xf32>
    %28 = vector.broadcast %27 : vector<1x32xf32> to vector<16x32xf32>
    %29 = arith.addf %26, %28 : vector<16x32xf32>
    %30 = arith.negf %29 : vector<16x32xf32>
    %31 = math.exp %30 : vector<16x32xf32>
    %cst_11 = arith.constant 1.000000e+00 : f32
    %32 = vector.broadcast %cst_11 : f32 to vector<16x32xf32>
    %33 = arith.addf %32, %31 : vector<16x32xf32>
    %34 = arith.divf %32, %33 : vector<16x32xf32>
    %35 = arith.mulf %29, %34 : vector<16x32xf32>
    %c48 = arith.constant 48 : index
    %c0_12 = arith.constant 0 : index
    %36 = vector.load %arg2[%c48, %c0_12] : memref<432x128xbf16, #tpu.memory_space<vmem>>, vector<32x32xbf16>
    %37 = arith.truncf %35 : vector<16x32xf32> to vector<16x32xbf16>
    %cst_13 = arith.constant dense<0.000000e+00> : vector<16x32xf32>
    %38 = tpu.matmul %37, %36, %cst_13 {dimension_numbers = #tpu.dot_dimension_numbers<[1], [0], [0], [1], [0, 0, 1, 1], [], []>} : vector<16x32xbf16>, vector<32x32xbf16>, vector<16x32xf32> -> vector<16x32xf32>
    %39 = arith.truncf %38 : vector<16x32xf32> to vector<16x32xbf16>
    %cst_14 = arith.constant dense<0.000000e+00> : vector<16x32xf32>
    %40 = tpu.matmul %2, %39, %cst_14 {dimension_numbers = #tpu.dot_dimension_numbers<[1], [0], [0], [1], [0, 0, 1, 1], [], []>} : vector<16x16xbf16>, vector<16x32xbf16>, vector<16x32xf32> -> vector<16x32xf32>
    %41 = vector.extract_strided_slice %3 {offsets = [3, 0], sizes = [1, 32], strides = [1, 1]} : vector<24x128xf32> to vector<1x32xf32>
    %42 = vector.broadcast %41 : vector<1x32xf32> to vector<16x32xf32>
    %43 = arith.mulf %40, %42 : vector<16x32xf32>
    %44 = vector.extract_strided_slice %3 {offsets = [9, 0], sizes = [1, 32], strides = [1, 1]} : vector<24x128xf32> to vector<1x32xf32>
    %45 = vector.broadcast %44 : vector<1x32xf32> to vector<16x32xf32>
    %46 = arith.addf %43, %45 : vector<16x32xf32>
    %47 = arith.negf %46 : vector<16x32xf32>
    %48 = math.exp %47 : vector<16x32xf32>
    %cst_15 = arith.constant 1.000000e+00 : f32
    %49 = vector.broadcast %cst_15 : f32 to vector<16x32xf32>
    %50 = arith.addf %49, %48 : vector<16x32xf32>
    %51 = arith.divf %49, %50 : vector<16x32xf32>
    %52 = arith.mulf %46, %51 : vector<16x32xf32>
    %53 = arith.addf %52, %35 : vector<16x32xf32>
    %c80 = arith.constant 80 : index
    %c0_16 = arith.constant 0 : index
    %54 = vector.load %arg2[%c80, %c0_16] : memref<432x128xbf16, #tpu.memory_space<vmem>>, vector<32x32xbf16>
    %55 = arith.truncf %53 : vector<16x32xf32> to vector<16x32xbf16>
    %cst_17 = arith.constant dense<0.000000e+00> : vector<16x32xf32>
    %56 = tpu.matmul %55, %54, %cst_17 {dimension_numbers = #tpu.dot_dimension_numbers<[1], [0], [0], [1], [0, 0, 1, 1], [], []>} : vector<16x32xbf16>, vector<32x32xbf16>, vector<16x32xf32> -> vector<16x32xf32>
    %57 = arith.truncf %56 : vector<16x32xf32> to vector<16x32xbf16>
    %cst_18 = arith.constant dense<0.000000e+00> : vector<16x32xf32>
    %58 = tpu.matmul %2, %57, %cst_18 {dimension_numbers = #tpu.dot_dimension_numbers<[1], [0], [0], [1], [0, 0, 1, 1], [], []>} : vector<16x16xbf16>, vector<16x32xbf16>, vector<16x32xf32> -> vector<16x32xf32>
    %59 = vector.extract_strided_slice %3 {offsets = [4, 0], sizes = [1, 32], strides = [1, 1]} : vector<24x128xf32> to vector<1x32xf32>
    %60 = vector.broadcast %59 : vector<1x32xf32> to vector<16x32xf32>
    %61 = arith.mulf %58, %60 : vector<16x32xf32>
    %62 = vector.extract_strided_slice %3 {offsets = [10, 0], sizes = [1, 32], strides = [1, 1]} : vector<24x128xf32> to vector<1x32xf32>
    %63 = vector.broadcast %62 : vector<1x32xf32> to vector<16x32xf32>
    %64 = arith.addf %61, %63 : vector<16x32xf32>
    %65 = arith.negf %64 : vector<16x32xf32>
    %66 = math.exp %65 : vector<16x32xf32>
    %cst_19 = arith.constant 1.000000e+00 : f32
    %67 = vector.broadcast %cst_19 : f32 to vector<16x32xf32>
    %68 = arith.addf %67, %66 : vector<16x32xf32>
    %69 = arith.divf %67, %68 : vector<16x32xf32>
    %70 = arith.mulf %64, %69 : vector<16x32xf32>
    %71 = arith.addf %70, %53 : vector<16x32xf32>
    %c112 = arith.constant 112 : index
    %c0_20 = arith.constant 0 : index
    %72 = vector.load %arg2[%c112, %c0_20] : memref<432x128xbf16, #tpu.memory_space<vmem>>, vector<32x32xbf16>
    %73 = arith.truncf %71 : vector<16x32xf32> to vector<16x32xbf16>
    %cst_21 = arith.constant dense<0.000000e+00> : vector<16x32xf32>
    %74 = tpu.matmul %73, %72, %cst_21 {dimension_numbers = #tpu.dot_dimension_numbers<[1], [0], [0], [1], [0, 0, 1, 1], [], []>} : vector<16x32xbf16>, vector<32x32xbf16>, vector<16x32xf32> -> vector<16x32xf32>
    %75 = arith.truncf %74 : vector<16x32xf32> to vector<16x32xbf16>
    %cst_22 = arith.constant dense<0.000000e+00> : vector<16x32xf32>
    %76 = tpu.matmul %2, %75, %cst_22 {dimension_numbers = #tpu.dot_dimension_numbers<[1], [0], [0], [1], [0, 0, 1, 1], [], []>} : vector<16x16xbf16>, vector<16x32xbf16>, vector<16x32xf32> -> vector<16x32xf32>
    %77 = vector.extract_strided_slice %3 {offsets = [5, 0], sizes = [1, 32], strides = [1, 1]} : vector<24x128xf32> to vector<1x32xf32>
    %78 = vector.broadcast %77 : vector<1x32xf32> to vector<16x32xf32>
    %79 = arith.mulf %76, %78 : vector<16x32xf32>
    %80 = vector.extract_strided_slice %3 {offsets = [11, 0], sizes = [1, 32], strides = [1, 1]} : vector<24x128xf32> to vector<1x32xf32>
    %81 = vector.broadcast %80 : vector<1x32xf32> to vector<16x32xf32>
    %82 = arith.addf %79, %81 : vector<16x32xf32>
    %83 = arith.negf %82 : vector<16x32xf32>
    %84 = math.exp %83 : vector<16x32xf32>
    %cst_23 = arith.constant 1.000000e+00 : f32
    %85 = vector.broadcast %cst_23 : f32 to vector<16x32xf32>
    %86 = arith.addf %85, %84 : vector<16x32xf32>
    %87 = arith.divf %85, %86 : vector<16x32xf32>
    %88 = arith.mulf %82, %87 : vector<16x32xf32>
    %89 = arith.addf %88, %71 : vector<16x32xf32>
    %c144 = arith.constant 144 : index
    %c0_24 = arith.constant 0 : index
    %90 = vector.load %arg2[%c144, %c0_24] : memref<432x128xbf16, #tpu.memory_space<vmem>>, vector<32x32xbf16>
    %91 = arith.truncf %89 : vector<16x32xf32> to vector<16x32xbf16>
    %cst_25 = arith.constant dense<0.000000e+00> : vector<16x32xf32>
    %92 = tpu.matmul %91, %90, %cst_25 {dimension_numbers = #tpu.dot_dimension_numbers<[1], [0], [0], [1], [0, 0, 1, 1], [], []>} : vector<16x32xbf16>, vector<32x32xbf16>, vector<16x32xf32> -> vector<16x32xf32>
    %93 = arith.truncf %92 : vector<16x32xf32> to vector<16x32xbf16>
    %cst_26 = arith.constant dense<0.000000e+00> : vector<16x32xf32>
    %94 = tpu.matmul %2, %93, %cst_26 {dimension_numbers = #tpu.dot_dimension_numbers<[1], [0], [0], [1], [0, 0, 1, 1], [], []>} : vector<16x16xbf16>, vector<16x32xbf16>, vector<16x32xf32> -> vector<16x32xf32>
    %95 = vector.extract_strided_slice %3 {offsets = [6, 0], sizes = [1, 32], strides = [1, 1]} : vector<24x128xf32> to vector<1x32xf32>
    %96 = vector.broadcast %95 : vector<1x32xf32> to vector<16x32xf32>
    %97 = arith.mulf %94, %96 : vector<16x32xf32>
    %98 = vector.extract_strided_slice %3 {offsets = [12, 0], sizes = [1, 32], strides = [1, 1]} : vector<24x128xf32> to vector<1x32xf32>
    %99 = vector.broadcast %98 : vector<1x32xf32> to vector<16x32xf32>
    %100 = arith.addf %97, %99 : vector<16x32xf32>
    %101 = arith.negf %100 : vector<16x32xf32>
    %102 = math.exp %101 : vector<16x32xf32>
    %cst_27 = arith.constant 1.000000e+00 : f32
    %103 = vector.broadcast %cst_27 : f32 to vector<16x32xf32>
    %104 = arith.addf %103, %102 : vector<16x32xf32>
    %105 = arith.divf %103, %104 : vector<16x32xf32>
    %106 = arith.mulf %100, %105 : vector<16x32xf32>
    %107 = arith.addf %106, %89 : vector<16x32xf32>
    %c176 = arith.constant 176 : index
    %c0_28 = arith.constant 0 : index
    %108 = vector.load %arg2[%c176, %c0_28] : memref<432x128xbf16, #tpu.memory_space<vmem>>, vector<32x32xbf16>
    %109 = arith.truncf %107 : vector<16x32xf32> to vector<16x32xbf16>
    %cst_29 = arith.constant dense<0.000000e+00> : vector<16x32xf32>
    %110 = tpu.matmul %109, %108, %cst_29 {dimension_numbers = #tpu.dot_dimension_numbers<[1], [0], [0], [1], [0, 0, 1, 1], [], []>} : vector<16x32xbf16>, vector<32x32xbf16>, vector<16x32xf32> -> vector<16x32xf32>
    %111 = arith.truncf %110 : vector<16x32xf32> to vector<16x32xbf16>
    %cst_30 = arith.constant dense<0.000000e+00> : vector<16x32xf32>
    %112 = tpu.matmul %2, %111, %cst_30 {dimension_numbers = #tpu.dot_dimension_numbers<[1], [0], [0], [1], [0, 0, 1, 1], [], []>} : vector<16x16xbf16>, vector<16x32xbf16>, vector<16x32xf32> -> vector<16x32xf32>
    %113 = vector.extract_strided_slice %3 {offsets = [7, 0], sizes = [1, 32], strides = [1, 1]} : vector<24x128xf32> to vector<1x32xf32>
    %114 = vector.broadcast %113 : vector<1x32xf32> to vector<16x32xf32>
    %115 = arith.mulf %112, %114 : vector<16x32xf32>
    %116 = vector.extract_strided_slice %3 {offsets = [13, 0], sizes = [1, 32], strides = [1, 1]} : vector<24x128xf32> to vector<1x32xf32>
    %117 = vector.broadcast %116 : vector<1x32xf32> to vector<16x32xf32>
    %118 = arith.addf %115, %117 : vector<16x32xf32>
    %119 = arith.negf %118 : vector<16x32xf32>
    %120 = math.exp %119 : vector<16x32xf32>
    %cst_31 = arith.constant 1.000000e+00 : f32
    %121 = vector.broadcast %cst_31 : f32 to vector<16x32xf32>
    %122 = arith.addf %121, %120 : vector<16x32xf32>
    %123 = arith.divf %121, %122 : vector<16x32xf32>
    %124 = arith.mulf %118, %123 : vector<16x32xf32>
    %125 = arith.addf %124, %107 : vector<16x32xf32>
    %c208 = arith.constant 208 : index
    %c0_32 = arith.constant 0 : index
    %126 = vector.load %arg2[%c208, %c0_32] : memref<432x128xbf16, #tpu.memory_space<vmem>>, vector<32x128xbf16>
    %127 = arith.truncf %125 : vector<16x32xf32> to vector<16x32xbf16>
    %cst_33 = arith.constant dense<0.000000e+00> : vector<16x128xf32>
    %128 = tpu.matmul %127, %126, %cst_33 {dimension_numbers = #tpu.dot_dimension_numbers<[1], [0], [0], [1], [0, 0, 1, 1], [], []>} : vector<16x32xbf16>, vector<32x128xbf16>, vector<16x128xf32> -> vector<16x128xf32>
    %129 = vector.extract_strided_slice %3 {offsets = [14, 0], sizes = [1, 128], strides = [1, 1]} : vector<24x128xf32> to vector<1x128xf32>
    %130 = vector.broadcast %129 : vector<1x128xf32> to vector<16x128xf32>
    %131 = arith.mulf %128, %130 : vector<16x128xf32>
    %132 = vector.extract_strided_slice %3 {offsets = [15, 0], sizes = [1, 128], strides = [1, 1]} : vector<24x128xf32> to vector<1x128xf32>
    %133 = vector.broadcast %132 : vector<1x128xf32> to vector<16x128xf32>
    %134 = arith.addf %131, %133 : vector<16x128xf32>
    %135 = arith.negf %134 : vector<16x128xf32>
    %136 = math.exp %135 : vector<16x128xf32>
    %cst_34 = arith.constant 1.000000e+00 : f32
    %137 = vector.broadcast %cst_34 : f32 to vector<16x128xf32>
    %138 = arith.addf %137, %136 : vector<16x128xf32>
    %139 = arith.divf %137, %138 : vector<16x128xf32>
    %140 = arith.mulf %134, %139 : vector<16x128xf32>
    %c240 = arith.constant 240 : index
    %c0_35 = arith.constant 0 : index
    %141 = vector.load %arg2[%c240, %c0_35] : memref<432x128xbf16, #tpu.memory_space<vmem>>, vector<128x64xbf16>
    %142 = arith.truncf %140 : vector<16x128xf32> to vector<16x128xbf16>
    %cst_36 = arith.constant dense<0.000000e+00> : vector<16x64xf32>
    %143 = tpu.matmul %142, %141, %cst_36 {dimension_numbers = #tpu.dot_dimension_numbers<[1], [0], [0], [1], [0, 0, 1, 1], [], []>} : vector<16x128xbf16>, vector<128x64xbf16>, vector<16x64xf32> -> vector<16x64xf32>
    %144 = vector.extract_strided_slice %3 {offsets = [16, 0], sizes = [1, 64], strides = [1, 1]} : vector<24x128xf32> to vector<1x64xf32>
    %145 = vector.broadcast %144 : vector<1x64xf32> to vector<16x64xf32>
    %146 = arith.mulf %143, %145 : vector<16x64xf32>
    %147 = vector.extract_strided_slice %3 {offsets = [17, 0], sizes = [1, 64], strides = [1, 1]} : vector<24x128xf32> to vector<1x64xf32>
    %148 = vector.broadcast %147 : vector<1x64xf32> to vector<16x64xf32>
    %149 = arith.addf %146, %148 : vector<16x64xf32>
    %150 = arith.negf %149 : vector<16x64xf32>
    %151 = math.exp %150 : vector<16x64xf32>
    %cst_37 = arith.constant 1.000000e+00 : f32
    %152 = vector.broadcast %cst_37 : f32 to vector<16x64xf32>
    %153 = arith.addf %152, %151 : vector<16x64xf32>
    %154 = arith.divf %152, %153 : vector<16x64xf32>
    %155 = arith.mulf %149, %154 : vector<16x64xf32>
    %c368 = arith.constant 368 : index
    %c0_38 = arith.constant 0 : index
    %156 = vector.load %arg2[%c368, %c0_38] : memref<432x128xbf16, #tpu.memory_space<vmem>>, vector<64x128xbf16>
    %157 = arith.truncf %155 : vector<16x64xf32> to vector<16x64xbf16>
    %cst_39 = arith.constant dense<0.000000e+00> : vector<16x128xf32>
    %158 = tpu.matmul %157, %156, %cst_39 {dimension_numbers = #tpu.dot_dimension_numbers<[1], [0], [0], [1], [0, 0, 1, 1], [], []>} : vector<16x64xbf16>, vector<64x128xbf16>, vector<16x128xf32> -> vector<16x128xf32>
    %159 = vector.extract_strided_slice %3 {offsets = [18, 0], sizes = [1, 128], strides = [1, 1]} : vector<24x128xf32> to vector<1x128xf32>
    %160 = vector.broadcast %159 : vector<1x128xf32> to vector<16x128xf32>
    %161 = arith.addf %158, %160 : vector<16x128xf32>
    %c0_40 = arith.constant 0 : index
    %c0_41 = arith.constant 0 : index
    %162 = vector.load %arg4[%c0_40, %c0_41] : memref<16x128xf32, #tpu.memory_space<vmem>>, vector<16x128xf32>
    tpu.vector_store %arg4[%c0_40, %c0_41], %161 {strides = array<i32>} : memref<16x128xf32, #tpu.memory_space<vmem>>, vector<16x128xf32>,
    return
  }
}

</mosaic_0001>

<llo_original>
// kernel: tpu_custom_call.1
$region0: #{tpu_custom_call.1}
  #allocation0 [shape = 'u32[]', space=smem, size = 0x4, offset = 0x4, fixed_abs, tag = 'smem constant byte address 0x4 - core index']
  #allocation1 [shape = 'u32[144,128]{1,0:T(1,128)}', space=vmem, size = 0x12000, scoped, tag = 'internal scratch']
  %s0 = inlined_call_operand.hbm [shape: f32[16,16], index: 0, kind: input, shape index: {}]
  %s1 = inlined_call_operand.hbm [shape: f32[16,16], index: 1, kind: input, shape index: {}]
  %s2 = inlined_call_operand.hbm [shape: bf16[432,128], index: 2, kind: input, shape index: {}]
  %s3 = inlined_call_operand.hbm [shape: f32[24,128], index: 3, kind: input, shape index: {}]
  %s4 = inlined_call_operand.hbm [shape: f32[16,128], index: 4, kind: output, shape index: {}]
  %s5 = sld [smem:[#allocation0]]
  $region42: #{tpu_custom_call.1} parent=0
    _
  %s7 = ssub.s32 1, %s5
  %s8 = scalar_select 0, %s7, %s5
  $region1: #{tpu_custom_call.1} parent=0
    #allocation2 [shape = 'u8[8192]{0}', space=vmem, size = 0x2000, scoped, tag = 'input window, operand 0, single buffered']
    #allocation3 [shape = 's32[1]{0}', space=sflag, size = 0x4, scoped, tag = 'scoped memory for tpu_custom_call.1']
    #allocation4 [shape = 's32[1]{0}', space=sflag, size = 0x4, scoped, tag = 'scoped memory for tpu_custom_call.1']
    #allocation5 [shape = 'u8[8192]{0}', space=vmem, size = 0x2000, scoped, tag = 'input window, operand 1, single buffered']
    #allocation6 [shape = 's32[1]{0}', space=sflag, size = 0x4, scoped, tag = 'scoped memory for tpu_custom_call.1']
    #allocation7 [shape = 'u8[110592]{0}', space=vmem, size = 0x1b000, scoped, tag = 'input window, operand 2, single buffered']
    #allocation8 [shape = 'u8[12288]{0}', space=vmem, size = 0x3000, scoped, tag = 'input window, operand 3, single buffered']
    #allocation9 [shape = 's32[1]{0}', space=sflag, size = 0x4, scoped, tag = 'scoped memory for tpu_custom_call.1']
    #allocation10 [shape = 'u8[8192]{0}', space=vmem, size = 0x2000, scoped, tag = 'output window, operand 0, single buffered']
    %9 = vsyncpa [#allocation3], 0
    %10 = vsyncpa [#allocation6], 0
    %11 = vsyncpa [#allocation9], 0
    %12 = vsyncpa [#allocation4], 0
    // Predicated region
    $region2: #{tpu_custom_call.1} parent=1 // pred_check
      _
    $region3: #{tpu_custom_call.1} parent=1 // pred_check_branch
      %14 = sbr.rel (0) target = $region5
    $region4: #{tpu_custom_call.1} parent=1 // pred_region
      %s16 = ssub.s32 256, 256
      %17 = vsyncadd [#allocation3], %s16
      %s18 = sshll.u32 [#allocation2], 4
      %s19 = int_to_ptr.vmem [resolvable:$true] %s18
      %24 = dma.hbm_to_vmem [thread:$0]  %s0, 256, %s19, [#allocation3], 128, 128, 8
    $region5: #{tpu_custom_call.1} parent=1 // pred_fallthru
      _
    // Predicated region
    $region6: #{tpu_custom_call.1} parent=1 // pred_check
      _
    $region7: #{tpu_custom_call.1} parent=1 // pred_check_branch
      %26 = sbr.rel (0) target = $region9
    $region8: #{tpu_custom_call.1} parent=1 // pred_region
      %s28 = ssub.s32 256, 256
      %29 = vsyncadd [#allocation6], %s28
      %s30 = sshll.u32 [#allocation5], 4
      %s31 = int_to_ptr.vmem [resolvable:$true] %s30
      %36 = dma.hbm_to_vmem [thread:$0]  %s1, 256, %s31, [#allocation6], 128, 128, 8
    $region9: #{tpu_custom_call.1} parent=1 // pred_fallthru
      _
    // Predicated region
    $region10: #{tpu_custom_call.1} parent=1 // pred_check
      _
    $region11: #{tpu_custom_call.1} parent=1 // pred_check_branch
      %38 = sbr.rel (0) target = $region13
    $region12: #{tpu_custom_call.1} parent=1 // pred_region
      %s40 = ssub.s32 3456, 3456
      %41 = vsyncadd [#allocation6], %s40
      %s42 = sshll.u32 [#allocation7], 4
      %s43 = int_to_ptr.vmem [resolvable:$true] %s42
      %48 = dma.hbm_to_vmem [thread:$0]  %s2, 3456, %s43, [#allocation6], 64, 64, 4
    $region13: #{tpu_custom_call.1} parent=1 // pred_fallthru
      _
    // Predicated region
    $region14: #{tpu_custom_call.1} parent=1 // pred_check
      _
    $region15: #{tpu_custom_call.1} parent=1 // pred_check_branch
      %50 = sbr.rel (0) target = $region17
    $region16: #{tpu_custom_call.1} parent=1 // pred_region
      %s52 = ssub.s32 384, 384
      %53 = vsyncadd [#allocation9], %s52
      %s54 = sshll.u32 [#allocation8], 4
      %s55 = int_to_ptr.vmem [resolvable:$true] %s54
      %60 = dma.hbm_to_vmem [thread:$0]  %s3, 384, %s55, [#allocation9], 128, 128, 8
    $region17: #{tpu_custom_call.1} parent=1 // pred_fallthru
      _
    // Predicated region
    $region18: #{tpu_custom_call.1} parent=1 // pred_check
      _
    $region19: #{tpu_custom_call.1} parent=1 // pred_check_branch
      %62 = sbr.rel (0) target = $region21
    $region20: #{tpu_custom_call.1} parent=1 // pred_region
      %63 = dma.done [#allocation3], 256
    $region21: #{tpu_custom_call.1} parent=1 // pred_fallthru
      _
    // Predicated region
    $region22: #{tpu_custom_call.1} parent=1 // pred_check
      _
    $region23: #{tpu_custom_call.1} parent=1 // pred_check_branch
      %65 = sbr.rel (0) target = $region25
    $region24: #{tpu_custom_call.1} parent=1 // pred_region
      %66 = dma.done [#allocation6], 256
    $region25: #{tpu_custom_call.1} parent=1 // pred_fallthru
      _
    // Predicated region
    $region26: #{tpu_custom_call.1} parent=1 // pred_check
      _
    $region27: #{tpu_custom_call.1} parent=1 // pred_check_branch
      %68 = sbr.rel (0) target = $region29
    $region28: #{tpu_custom_call.1} parent=1 // pred_region
      %69 = dma.done [#allocation6], 3456
    $region29: #{tpu_custom_call.1} parent=1 // pred_fallthru
      _
    // Predicated region
    $region30: #{tpu_custom_call.1} parent=1 // pred_check
      _
    $region31: #{tpu_custom_call.1} parent=1 // pred_check_branch
      %71 = sbr.rel (0) target = $region33
    $region32: #{tpu_custom_call.1} parent=1 // pred_region
      %72 = dma.done [#allocation9], 384
    $region33: #{tpu_custom_call.1} parent=1 // pred_fallthru
      _
    %v74 = vld [vmem:[#allocation2] sm:$0xff]
    %v75 = vld [vmem:[#allocation2 + $0x8] sm:$0xff]
    %v76 = vld [vmem:[#allocation5] sm:$0xff]
    %v77 = vld [vmem:[#allocation5 + $0x8] sm:$0xff]
    %v78 = vpack.c.bf16 %v77, %v76
    %v79 = vld [vmem:[#allocation8] sm:$0xff]
    %v80 = vld [vmem:[#allocation8 + $0x8] sm:$0xff]
    %v81 = vld [vmem:[#allocation8 + $0x10] sm:$0xff]
    %v82 = vld [vmem:[#allocation7] sm:$0xf]
    %v83 = vld [vmem:[#allocation7 + $0x4] sm:$0xf]
    %v84 = vpack.c.bf16 %v75, %v74
    %v87 = vunpack.c.l.b16 %v82
    %v88 = vunpack.c.l.b16 %v83
    %v89 = vpack.c.b16 %v88, %v87
    %vm91 = vcmask 130048
    %v93 = vsel %vm91, %v84, 0
    %95 = vmatprep.subr.bf16.mxu0 0
    %96 = vmatpush1.bf16.msra.mxu0 %v89
    %97 = vmatprep.subr.bf16.mxu0 0
    %98 = vmatpush1.bf16.msra.mxu0 0
    %99 = vmatprep.subr.bf16.mxu0 0
    %100 = vmatpush1.bf16.msra.mxu0 0
    %101 = vmatprep.subr.bf16.mxu0 0
    %102 = vmatpush1.bf16.msra.mxu0 0
    %103 = vmatprep.subr.bf16.mxu0 0
    %104 = vmatpush1.bf16.msra.mxu0 0
    %105 = vmatprep.subr.bf16.mxu0 0
    %106 = vmatpush1.bf16.msra.mxu0 0
    %107 = vmatprep.subr.bf16.mxu0 0
    %108 = vmatpush1.bf16.msra.mxu0 0
    %109 = vmatprep.subr.bf16.mxu0 0
    %110 = vmatpush1.bf16.msra.mxu0 0
    %111 = vmatprep.subr.bf16.mxu0 0
    %112 = vmatpush1.bf16.msra.mxu0 0
    %113 = vmatprep.subr.bf16.mxu0 0
    %114 = vmatpush1.bf16.msra.mxu0 0
    %115 = vmatprep.subr.bf16.mxu0 0
    %116 = vmatpush1.bf16.msra.mxu0 0
    %117 = vmatprep.subr.bf16.mxu0 0
    %118 = vmatpush1.bf16.msra.mxu0 0
    %119 = vmatprep.subr.bf16.mxu0 0
    %120 = vmatpush1.bf16.msra.mxu0 0
    %121 = vmatprep.subr.bf16.mxu0 0
    %122 = vmatpush1.bf16.msra.mxu0 0
    %123 = vmatprep.subr.bf16.mxu0 0
    %124 = vmatpush1.bf16.msra.mxu0 0
    %125 = vmatprep.subr.bf16.mxu0 0
    %126 = vmatpush1.bf16.msra.mxu0 0
    %127 = vmatprep.mubr.bf16.mxu0 0
    %128 = vmatmul.mubr.bf16.gmra.mrb[0].mxu0 %v93
    %v129 = vpop.f32.mrb[0].mxu0
    %v130 = vadd.f32 0.0, %v129
    %v131 = vpop.f32.mrb[0].mxu0
    %v132 = vpop.f32.mrb[0].mxu0
    %v133 = vadd.f32 0.0, %v132
    %v134 = vpop.f32.mrb[0].mxu0
    %135 = vdwg.mxu0
    %v136 = vlaneseq
    %v137 = vshrl.u32 %v136, 7
    %v138 = vsub.s32 0, %v137
    %v139 = vrot.slane %v79, %v138
    %v140 = vmul.f32 %v130, %v139
    %v141 = vmul.f32 %v133, %v139
    %v142 = vlaneseq
    %v143 = vshrl.u32 %v142, 7
    %v144 = vsub.s32 1, %v143
    %v145 = vrot.slane %v79, %v144
    %v146 = vadd.f32 %v140, %v145
    %v147 = vadd.f32 %v141, %v145
    %v148 = vxor.u32 %v146, 2147483648
    %v149 = vxor.u32 %v147, 2147483648
    %v150 = vmul.f32 %v148, 1.442695
    %v151 = vpow.pop %v150
    %v152 = vmul.f32 %v149, 1.442695
    %v153 = vpow.pop %v152
    %v154 = vadd.f32 %v151, 1.0
    %v155 = vadd.f32 %v153, 1.0
    %v156 = vrcp.pop %v154
    %v157 = vmul.f32 1.0, %v156
    %v158 = vrcp.pop %v155
    %v159 = vmul.f32 1.0, %v158
    %v160 = vmul.f32 %v146, %v157
    %v161 = vmul.f32 %v147, %v159
    %v162 = vld [vmem:[#allocation7 + $0x8] sm:$0xf]
    %v163 = vld [vmem:[#allocation7 + $0xc] sm:$0xf]
    %v164 = vld [vmem:[#allocation7 + $0x10] sm:$0xf]
    %v165 = vld [vmem:[#allocation7 + $0x14] sm:$0xf]
    %v166 = vpack.c.bf16 %v161, %v160
    %v171 = vunpack.c.l.b16 %v162
    %v172 = vunpack.c.l.b16 %v163
    %v173 = vunpack.c.l.b16 %v164
    %v174 = vunpack.c.l.b16 %v165
    %v175 = vpack.c.b16 %v172, %v171
    %v176 = vpack.c.b16 %v174, %v173
    %vm179 = vcmask 261120
    %v181 = vsel %vm179, %v166, 0
    %183 = vmatprep.subr.bf16.mxu0 0
    %184 = vmatpush1.bf16.msra.mxu0 %v175
    %185 = vmatprep.subr.bf16.mxu0 0
    %186 = vmatpush1.bf16.msra.mxu0 %v176
    %187 = vmatprep.subr.bf16.mxu0 0
    %188 = vmatpush1.bf16.msra.mxu0 0
    %189 = vmatprep.subr.bf16.mxu0 0
    %190 = vmatpush1.bf16.msra.mxu0 0
    %191 = vmatprep.subr.bf16.mxu0 0
    %192 = vmatpush1.bf16.msra.mxu0 0
    %193 = vmatprep.subr.bf16.mxu0 0
    %194 = vmatpush1.bf16.msra.mxu0 0
    %195 = vmatprep.subr.bf16.mxu0 0
    %196 = vmatpush1.bf16.msra.mxu0 0
    %197 = vmatprep.subr.bf16.mxu0 0
    %198 = vmatpush1.bf16.msra.mxu0 0
    %199 = vmatprep.subr.bf16.mxu0 0
    %200 = vmatpush1.bf16.msra.mxu0 0
    %201 = vmatprep.subr.bf16.mxu0 0
    %202 = vmatpush1.bf16.msra.mxu0 0
    %203 = vmatprep.subr.bf16.mxu0 0
    %204 = vmatpush1.bf16.msra.mxu0 0
    %205 = vmatprep.subr.bf16.mxu0 0
    %206 = vmatpush1.bf16.msra.mxu0 0
    %207 = vmatprep.subr.bf16.mxu0 0
    %208 = vmatpush1.bf16.msra.mxu0 0
    %209 = vmatprep.subr.bf16.mxu0 0
    %210 = vmatpush1.bf16.msra.mxu0 0
    %211 = vmatprep.subr.bf16.mxu0 0
    %212 = vmatpush1.bf16.msra.mxu0 0
    %213 = vmatprep.subr.bf16.mxu0 0
    %214 = vmatpush1.bf16.msra.mxu0 0
    %215 = vmatprep.mubr.bf16.mxu0 0
    %216 = vmatmul.mubr.bf16.gmra.mrb[0].mxu0 %v181
    %v217 = vpop.f32.mrb[0].mxu0
    %v218 = vadd.f32 0.0, %v217
    %v219 = vpop.f32.mrb[0].mxu0
    %v220 = vpop.f32.mrb[0].mxu0
    %v221 = vadd.f32 0.0, %v220
    %v222 = vpop.f32.mrb[0].mxu0
    %223 = vdwg.mxu0
    %v224 = vpack.c.bf16 %v221, %v218
    %v226 = vsel %vm91, %v78, 0
    %228 = vmatprep.subr.bf16.mxu0 0
    %229 = vmatpush1.bf16.msra.mxu0 %v224
    %230 = vmatprep.subr.bf16.mxu0 0
    %231 = vmatpush1.bf16.msra.mxu0 0
    %232 = vmatprep.subr.bf16.mxu0 0
    %233 = vmatpush1.bf16.msra.mxu0 0
    %234 = vmatprep.subr.bf16.mxu0 0
    %235 = vmatpush1.bf16.msra.mxu0 0
    %236 = vmatprep.subr.bf16.mxu0 0
    %237 = vmatpush1.bf16.msra.mxu0 0
    %238 = vmatprep.subr.bf16.mxu0 0
    %239 = vmatpush1.bf16.msra.mxu0 0
    %240 = vmatprep.subr.bf16.mxu0 0
    %241 = vmatpush1.bf16.msra.mxu0 0
    %242 = vmatprep.subr.bf16.mxu0 0
    %243 = vmatpush1.bf16.msra.mxu0 0
    %244 = vmatprep.subr.bf16.mxu0 0
    %245 = vmatpush1.bf16.msra.mxu0 0
    %246 = vmatprep.subr.bf16.mxu0 0
    %247 = vmatpush1.bf16.msra.mxu0 0
    %248 = vmatprep.subr.bf16.mxu0 0
    %249 = vmatpush1.bf16.msra.mxu0 0
    %250 = vmatprep.subr.bf16.mxu0 0
    %251 = vmatpush1.bf16.msra.mxu0 0
    %252 = vmatprep.subr.bf16.mxu0 0
    %253 = vmatpush1.bf16.msra.mxu0 0
    %254 = vmatprep.subr.bf16.mxu0 0
    %255 = vmatpush1.bf16.msra.mxu0 0
    %256 = vmatprep.subr.bf16.mxu0 0
    %257 = vmatpush1.bf16.msra.mxu0 0
    %258 = vmatprep.subr.bf16.mxu0 0
    %259 = vmatpush1.bf16.msra.mxu0 0
    %260 = vmatprep.mubr.bf16.mxu0 0
    %261 = vmatmul.mubr.bf16.gmra.mrb[0].mxu0 %v226
    %v262 = vpop.f32.mrb[0].mxu0
    %v263 = vadd.f32 0.0, %v262
    %v264 = vpop.f32.mrb[0].mxu0
    %v265 = vpop.f32.mrb[0].mxu0
    %v266 = vadd.f32 0.0, %v265
    %v267 = vpop.f32.mrb[0].mxu0
    %268 = vdwg.mxu0
    %v269 = vlaneseq
    %v270 = vshrl.u32 %v269, 7
    %v271 = vsub.s32 2, %v270
    %v272 = vrot.slane %v79, %v271
    %v273 = vmul.f32 %v263, %v272
    %v274 = vmul.f32 %v266, %v272
    %v275 = vlaneseq
    %v276 = vshrl.u32 %v275, 7
    %v277 = vsub.s32 0, %v276
    %v278 = vrot.slane %v80, %v277
    %v279 = vadd.f32 %v273, %v278
    %v280 = vadd.f32 %v274, %v278
    %v281 = vxor.u32 %v279, 2147483648
    %v282 = vxor.u32 %v280, 2147483648
    %v283 = vmul.f32 %v281, 1.442695
    %v284 = vpow.pop %v283
    %v285 = vmul.f32 %v282, 1.442695
    %v286 = vpow.pop %v285
    %v287 = vadd.f32 %v284, 1.0
    %v288 = vadd.f32 %v286, 1.0
    %v289 = vrcp.pop %v287
    %v290 = vmul.f32 1.0, %v289
    %v291 = vrcp.pop %v288
    %v292 = vmul.f32 1.0, %v291
    %v293 = vmul.f32 %v279, %v290
    %v294 = vmul.f32 %v280, %v292
    %v295 = vld [vmem:[#allocation7 + $0x18] sm:$0xf]
    %v296 = vld [vmem:[#allocation7 + $0x1c] sm:$0xf]
    %v297 = vld [vmem:[#allocation7 + $0x20] sm:$0xf]
    %v298 = vld [vmem:[#allocation7 + $0x24] sm:$0xf]
    %v299 = vpack.c.bf16 %v294, %v293
    %v304 = vunpack.c.l.b16 %v295
    %v305 = vunpack.c.l.b16 %v296
    %v306 = vunpack.c.l.b16 %v297
    %v307 = vunpack.c.l.b16 %v298
    %v308 = vpack.c.b16 %v305, %v304
    %v309 = vpack.c.b16 %v307, %v306
    %v313 = vsel %vm179, %v299, 0
    %315 = vmatprep.subr.bf16.mxu0 0
    %316 = vmatpush1.bf16.msra.mxu0 %v308
    %317 = vmatprep.subr.bf16.mxu0 0
    %318 = vmatpush1.bf16.msra.mxu0 %v309
    %319 = vmatprep.subr.bf16.mxu0 0
    %320 = vmatpush1.bf16.msra.mxu0 0
    %321 = vmatprep.subr.bf16.mxu0 0
    %322 = vmatpush1.bf16.msra.mxu0 0
    %323 = vmatprep.subr.bf16.mxu0 0
    %324 = vmatpush1.bf16.msra.mxu0 0
    %325 = vmatprep.subr.bf16.mxu0 0
    %326 = vmatpush1.bf16.msra.mxu0 0
    %327 = vmatprep.subr.bf16.mxu0 0
    %328 = vmatpush1.bf16.msra.mxu0 0
    %329 = vmatprep.subr.bf16.mxu0 0
    %330 = vmatpush1.bf16.msra.mxu0 0
    %331 = vmatprep.subr.bf16.mxu0 0
    %332 = vmatpush1.bf16.msra.mxu0 0
    %333 = vmatprep.subr.bf16.mxu0 0
    %334 = vmatpush1.bf16.msra.mxu0 0
    %335 = vmatprep.subr.bf16.mxu0 0
    %336 = vmatpush1.bf16.msra.mxu0 0
    %337 = vmatprep.subr.bf16.mxu0 0
    %338 = vmatpush1.bf16.msra.mxu0 0
    %339 = vmatprep.subr.bf16.mxu0 0
    %340 = vmatpush1.bf16.msra.mxu0 0
    %341 = vmatprep.subr.bf16.mxu0 0
    %342 = vmatpush1.bf16.msra.mxu0 0
    %343 = vmatprep.subr.bf16.mxu0 0
    %344 = vmatpush1.bf16.msra.mxu0 0
    %345 = vmatprep.subr.bf16.mxu0 0
    %346 = vmatpush1.bf16.msra.mxu0 0
    %347 = vmatprep.mubr.bf16.mxu0 0
    %348 = vmatmul.mubr.bf16.gmra.mrb[0].mxu0 %v313
    %v349 = vpop.f32.mrb[0].mxu0
    %v350 = vadd.f32 0.0, %v349
    %v351 = vpop.f32.mrb[0].mxu0
    %v352 = vpop.f32.mrb[0].mxu0
    %v353 = vadd.f32 0.0, %v352
    %v354 = vpop.f32.mrb[0].mxu0
    %355 = vdwg.mxu0
    %v356 = vpack.c.bf16 %v353, %v350
    %357 = vmatprep.subr.bf16.mxu0 0
    %358 = vmatpush1.bf16.msra.mxu0 %v356
    %359 = vmatprep.subr.bf16.mxu0 0
    %360 = vmatpush1.bf16.msra.mxu0 0
    %361 = vmatprep.subr.bf16.mxu0 0
    %362 = vmatpush1.bf16.msra.mxu0 0
    %363 = vmatprep.subr.bf16.mxu0 0
    %364 = vmatpush1.bf16.msra.mxu0 0
    %365 = vmatprep.subr.bf16.mxu0 0
    %366 = vmatpush1.bf16.msra.mxu0 0
    %367 = vmatprep.subr.bf16.mxu0 0
    %368 = vmatpush1.bf16.msra.mxu0 0
    %369 = vmatprep.subr.bf16.mxu0 0
    %370 = vmatpush1.bf16.msra.mxu0 0
    %371 = vmatprep.subr.bf16.mxu0 0
    %372 = vmatpush1.bf16.msra.mxu0 0
    %373 = vmatprep.subr.bf16.mxu0 0
    %374 = vmatpush1.bf16.msra.mxu0 0
    %375 = vmatprep.subr.bf16.mxu0 0
    %376 = vmatpush1.bf16.msra.mxu0 0
    %377 = vmatprep.subr.bf16.mxu0 0
    %378 = vmatpush1.bf16.msra.mxu0 0
    %379 = vmatprep.subr.bf16.mxu0 0
    %380 = vmatpush1.bf16.msra.mxu0 0
    %381 = vmatprep.subr.bf16.mxu0 0
    %382 = vmatpush1.bf16.msra.mxu0 0
    %383 = vmatprep.subr.bf16.mxu0 0
    %384 = vmatpush1.bf16.msra.mxu0 0
    %385 = vmatprep.subr.bf16.mxu0 0
    %386 = vmatpush1.bf16.msra.mxu0 0
    %387 = vmatprep.subr.bf16.mxu0 0
    %388 = vmatpush1.bf16.msra.mxu0 0
    %389 = vmatprep.mubr.bf16.mxu0 0
    %390 = vmatmul.mubr.bf16.gmra.mrb[0].mxu0 %v226
    %v391 = vpop.f32.mrb[0].mxu0
    %v392 = vadd.f32 0.0, %v391
    %v393 = vpop.f32.mrb[0].mxu0
    %v394 = vpop.f32.mrb[0].mxu0
    %v395 = vadd.f32 0.0, %v394
    %v396 = vpop.f32.mrb[0].mxu0
    %397 = vdwg.mxu0
    %v398 = vlaneseq
    %v399 = vshrl.u32 %v398, 7
    %v400 = vsub.s32 3, %v399
    %v401 = vrot.slane %v79, %v400
    %v402 = vmul.f32 %v392, %v401
    %v403 = vmul.f32 %v395, %v401
    %v404 = vlaneseq
    %v405 = vshrl.u32 %v404, 7
    %v406 = vsub.s32 1, %v405
    %v407 = vrot.slane %v80, %v406
    %v408 = vadd.f32 %v402, %v407
    %v409 = vadd.f32 %v403, %v407
    %v410 = vxor.u32 %v408, 2147483648
    %v411 = vxor.u32 %v409, 2147483648
    %v412 = vmul.f32 %v410, 1.442695
    %v413 = vpow.pop %v412
    %v414 = vmul.f32 %v411, 1.442695
    %v415 = vpow.pop %v414
    %v416 = vadd.f32 %v413, 1.0
    %v417 = vadd.f32 %v415, 1.0
    %v418 = vrcp.pop %v416
    %v419 = vmul.f32 1.0, %v418
    %v420 = vrcp.pop %v417
    %v421 = vmul.f32 1.0, %v420
    %v422 = vmul.f32 %v408, %v419
    %v423 = vmul.f32 %v409, %v421
    %v424 = vadd.f32 %v422, %v293
    %v425 = vadd.f32 %v423, %v294
    %v426 = vld [vmem:[#allocation7 + $0x28] sm:$0xf]
    %v427 = vld [vmem:[#allocation7 + $0x2c] sm:$0xf]
    %v428 = vld [vmem:[#allocation7 + $0x30] sm:$0xf]
    %v429 = vld [vmem:[#allocation7 + $0x34] sm:$0xf]
    %v430 = vpack.c.bf16 %v425, %v424
    %v435 = vunpack.c.l.b16 %v426
    %v436 = vunpack.c.l.b16 %v427
    %v437 = vunpack.c.l.b16 %v428
    %v438 = vunpack.c.l.b16 %v429
    %v439 = vpack.c.b16 %v436, %v435
    %v440 = vpack.c.b16 %v438, %v437
    %v444 = vsel %vm179, %v430, 0
    %446 = vmatprep.subr.bf16.mxu0 0
    %447 = vmatpush1.bf16.msra.mxu0 %v439
    %448 = vmatprep.subr.bf16.mxu0 0
    %449 = vmatpush1.bf16.msra.mxu0 %v440
    %450 = vmatprep.subr.bf16.mxu0 0
    %451 = vmatpush1.bf16.msra.mxu0 0
    %452 = vmatprep.subr.bf16.mxu0 0
    %453 = vmatpush1.bf16.msra.mxu0 0
    %454 = vmatprep.subr.bf16.mxu0 0
    %455 = vmatpush1.bf16.msra.mxu0 0
    %456 = vmatprep.subr.bf16.mxu0 0
    %457 = vmatpush1.bf16.msra.mxu0 0
    %458 = vmatprep.subr.bf16.mxu0 0
    %459 = vmatpush1.bf16.msra.mxu0 0
    %460 = vmatprep.subr.bf16.mxu0 0
    %461 = vmatpush1.bf16.msra.mxu0 0
    %462 = vmatprep.subr.bf16.mxu0 0
    %463 = vmatpush1.bf16.msra.mxu0 0
    %464 = vmatprep.subr.bf16.mxu0 0
    %465 = vmatpush1.bf16.msra.mxu0 0
    %466 = vmatprep.subr.bf16.mxu0 0
    %467 = vmatpush1.bf16.msra.mxu0 0
    %468 = vmatprep.subr.bf16.mxu0 0
    %469 = vmatpush1.bf16.msra.mxu0 0
    %470 = vmatprep.subr.bf16.mxu0 0
    %471 = vmatpush1.bf16.msra.mxu0 0
    %472 = vmatprep.subr.bf16.mxu0 0
    %473 = vmatpush1.bf16.msra.mxu0 0
    %474 = vmatprep.subr.bf16.mxu0 0
    %475 = vmatpush1.bf16.msra.mxu0 0
    %476 = vmatprep.subr.bf16.mxu0 0
    %477 = vmatpush1.bf16.msra.mxu0 0
    %478 = vmatprep.mubr.bf16.mxu0 0
    %479 = vmatmul.mubr.bf16.gmra.mrb[0].mxu0 %v444
    %v480 = vpop.f32.mrb[0].mxu0
    %v481 = vadd.f32 0.0, %v480
    %v482 = vpop.f32.mrb[0].mxu0
    %v483 = vpop.f32.mrb[0].mxu0
    %v484 = vadd.f32 0.0, %v483
    %v485 = vpop.f32.mrb[0].mxu0
    %486 = vdwg.mxu0
    %v487 = vpack.c.bf16 %v484, %v481
    %488 = vmatprep.subr.bf16.mxu0 0
    %489 = vmatpush1.bf16.msra.mxu0 %v487
    %490 = vmatprep.subr.bf16.mxu0 0
    %491 = vmatpush1.bf16.msra.mxu0 0
    %492 = vmatprep.subr.bf16.mxu0 0
    %493 = vmatpush1.bf16.msra.mxu0 0
    %494 = vmatprep.subr.bf16.mxu0 0
    %495 = vmatpush1.bf16.msra.mxu0 0
    %496 = vmatprep.subr.bf16.mxu0 0
    %497 = vmatpush1.bf16.msra.mxu0 0
    %498 = vmatprep.subr.bf16.mxu0 0
    %499 = vmatpush1.bf16.msra.mxu0 0
    %500 = vmatprep.subr.bf16.mxu0 0
    %501 = vmatpush1.bf16.msra.mxu0 0
    %502 = vmatprep.subr.bf16.mxu0 0
    %503 = vmatpush1.bf16.msra.mxu0 0
    %504 = vmatprep.subr.bf16.mxu0 0
    %505 = vmatpush1.bf16.msra.mxu0 0
    %506 = vmatprep.subr.bf16.mxu0 0
    %507 = vmatpush1.bf16.msra.mxu0 0
    %508 = vmatprep.subr.bf16.mxu0 0
    %509 = vmatpush1.bf16.msra.mxu0 0
    %510 = vmatprep.subr.bf16.mxu0 0
    %511 = vmatpush1.bf16.msra.mxu0 0
    %512 = vmatprep.subr.bf16.mxu0 0
    %513 = vmatpush1.bf16.msra.mxu0 0
    %514 = vmatprep.subr.bf16.mxu0 0
    %515 = vmatpush1.bf16.msra.mxu0 0
    %516 = vmatprep.subr.bf16.mxu0 0
    %517 = vmatpush1.bf16.msra.mxu0 0
    %518 = vmatprep.subr.bf16.mxu0 0
    %519 = vmatpush1.bf16.msra.mxu0 0
    %520 = vmatprep.mubr.bf16.mxu0 0
    %521 = vmatmul.mubr.bf16.gmra.mrb[0].mxu0 %v226
    %v522 = vpop.f32.mrb[0].mxu0
    %v523 = vadd.f32 0.0, %v522
    %v524 = vpop.f32.mrb[0].mxu0
    %v525 = vpop.f32.mrb[0].mxu0
    %v526 = vadd.f32 0.0, %v525
    %v527 = vpop.f32.mrb[0].mxu0
    %528 = vdwg.mxu0
    %v529 = vlaneseq
    %v530 = vshrl.u32 %v529, 7
    %v531 = vsub.s32 4, %v530
    %v532 = vrot.slane %v79, %v531
    %v533 = vmul.f32 %v523, %v532
    %v534 = vmul.f32 %v526, %v532
    %v535 = vlaneseq
    %v536 = vshrl.u32 %v535, 7
    %v537 = vsub.s32 2, %v536
    %v538 = vrot.slane %v80, %v537
    %v539 = vadd.f32 %v533, %v538
    %v540 = vadd.f32 %v534, %v538
    %v541 = vxor.u32 %v539, 2147483648
    %v542 = vxor.u32 %v540, 2147483648
    %v543 = vmul.f32 %v541, 1.442695
    %v544 = vpow.pop %v543
    %v545 = vmul.f32 %v542, 1.442695
    %v546 = vpow.pop %v545
    %v547 = vadd.f32 %v544, 1.0
    %v548 = vadd.f32 %v546, 1.0
    %v549 = vrcp.pop %v547
    %v550 = vmul.f32 1.0, %v549
    %v551 = vrcp.pop %v548
    %v552 = vmul.f32 1.0, %v551
    %v553 = vmul.f32 %v539, %v550
    %v554 = vmul.f32 %v540, %v552
    %v555 = vadd.f32 %v553, %v424
    %v556 = vadd.f32 %v554, %v425
    %v557 = vld [vmem:[#allocation7 + $0x38] sm:$0xf]
    %v558 = vld [vmem:[#allocation7 + $0x3c] sm:$0xf]
    %v559 = vld [vmem:[#allocation7 + $0x40] sm:$0xf]
    %v560 = vld [vmem:[#allocation7 + $0x44] sm:$0xf]
    %v561 = vpack.c.bf16 %v556, %v555
    %v566 = vunpack.c.l.b16 %v557
    %v567 = vunpack.c.l.b16 %v558
    %v568 = vunpack.c.l.b16 %v559
    %v569 = vunpack.c.l.b16 %v560
    %v570 = vpack.c.b16 %v567, %v566
    %v571 = vpack.c.b16 %v569, %v568
    %v575 = vsel %vm179, %v561, 0
    %577 = vmatprep.subr.bf16.mxu0 0
    %578 = vmatpush1.bf16.msra.mxu0 %v570
    %579 = vmatprep.subr.bf16.mxu0 0
    %580 = vmatpush1.bf16.msra.mxu0 %v571
    %581 = vmatprep.subr.bf16.mxu0 0
    %582 = vmatpush1.bf16.msra.mxu0 0
    %583 = vmatprep.subr.bf16.mxu0 0
    %584 = vmatpush1.bf16.msra.mxu0 0
    %585 = vmatprep.subr.bf16.mxu0 0
    %586 = vmatpush1.bf16.msra.mxu0 0
    %587 = vmatprep.subr.bf16.mxu0 0
    %588 = vmatpush1.bf16.msra.mxu0 0
    %589 = vmatprep.subr.bf16.mxu0 0
    %590 = vmatpush1.bf16.msra.mxu0 0
    %591 = vmatprep.subr.bf16.mxu0 0
    %592 = vmatpush1.bf16.msra.mxu0 0
    %593 = vmatprep.subr.bf16.mxu0 0
    %594 = vmatpush1.bf16.msra.mxu0 0
    %595 = vmatprep.subr.bf16.mxu0 0
    %596 = vmatpush1.bf16.msra.mxu0 0
    %597 = vmatprep.subr.bf16.mxu0 0
    %598 = vmatpush1.bf16.msra.mxu0 0
    %599 = vmatprep.subr.bf16.mxu0 0
    %600 = vmatpush1.bf16.msra.mxu0 0
    %601 = vmatprep.subr.bf16.mxu0 0
    %602 = vmatpush1.bf16.msra.mxu0 0
    %603 = vmatprep.subr.bf16.mxu0 0
    %604 = vmatpush1.bf16.msra.mxu0 0
    %605 = vmatprep.subr.bf16.mxu0 0
    %606 = vmatpush1.bf16.msra.mxu0 0
    %607 = vmatprep.subr.bf16.mxu0 0
    %608 = vmatpush1.bf16.msra.mxu0 0
    %609 = vmatprep.mubr.bf16.mxu0 0
    %610 = vmatmul.mubr.bf16.gmra.mrb[0].mxu0 %v575
    %v611 = vpop.f32.mrb[0].mxu0
    %v612 = vadd.f32 0.0, %v611
    %v613 = vpop.f32.mrb[0].mxu0
    %v614 = vpop.f32.mrb[0].mxu0
    %v615 = vadd.f32 0.0, %v614
    %v616 = vpop.f32.mrb[0].mxu0
    %617 = vdwg.mxu0
    %v618 = vpack.c.bf16 %v615, %v612
    %619 = vmatprep.subr.bf16.mxu0 0
    %620 = vmatpush1.bf16.msra.mxu0 %v618
    %621 = vmatprep.subr.bf16.mxu0 0
    %622 = vmatpush1.bf16.msra.mxu0 0
    %623 = vmatprep.subr.bf16.mxu0 0
    %624 = vmatpush1.bf16.msra.mxu0 0
    %625 = vmatprep.subr.bf16.mxu0 0
    %626 = vmatpush1.bf16.msra.mxu0 0
    %627 = vmatprep.subr.bf16.mxu0 0
    %628 = vmatpush1.bf16.msra.mxu0 0
    %629 = vmatprep.subr.bf16.mxu0 0
    %630 = vmatpush1.bf16.msra.mxu0 0
    %631 = vmatprep.subr.bf16.mxu0 0
    %632 = vmatpush1.bf16.msra.mxu0 0
    %633 = vmatprep.subr.bf16.mxu0 0
    %634 = vmatpush1.bf16.msra.mxu0 0
    %635 = vmatprep.subr.bf16.mxu0 0
    %636 = vmatpush1.bf16.msra.mxu0 0
    %637 = vmatprep.subr.bf16.mxu0 0
    %638 = vmatpush1.bf16.msra.mxu0 0
    %639 = vmatprep.subr.bf16.mxu0 0
    %640 = vmatpush1.bf16.msra.mxu0 0
    %641 = vmatprep.subr.bf16.mxu0 0
    %642 = vmatpush1.bf16.msra.mxu0 0
    %643 = vmatprep.subr.bf16.mxu0 0
    %644 = vmatpush1.bf16.msra.mxu0 0
    %645 = vmatprep.subr.bf16.mxu0 0
    %646 = vmatpush1.bf16.msra.mxu0 0
    %647 = vmatprep.subr.bf16.mxu0 0
    %648 = vmatpush1.bf16.msra.mxu0 0
    %649 = vmatprep.subr.bf16.mxu0 0
    %650 = vmatpush1.bf16.msra.mxu0 0
    %651 = vmatprep.mubr.bf16.mxu0 0
    %652 = vmatmul.mubr.bf16.gmra.mrb[0].mxu0 %v226
    %v653 = vpop.f32.mrb[0].mxu0
    %v654 = vadd.f32 0.0, %v653
    %v655 = vpop.f32.mrb[0].mxu0
    %v656 = vpop.f32.mrb[0].mxu0
    %v657 = vadd.f32 0.0, %v656
    %v658 = vpop.f32.mrb[0].mxu0
    %659 = vdwg.mxu0
    %v660 = vlaneseq
    %v661 = vshrl.u32 %v660, 7
    %v662 = vsub.s32 5, %v661
    %v663 = vrot.slane %v79, %v662
    %v664 = vmul.f32 %v654, %v663
    %v665 = vmul.f32 %v657, %v663
    %v666 = vlaneseq
    %v667 = vshrl.u32 %v666, 7
    %v668 = vsub.s32 3, %v667
    %v669 = vrot.slane %v80, %v668
    %v670 = vadd.f32 %v664, %v669
    %v671 = vadd.f32 %v665, %v669
    %v672 = vxor.u32 %v670, 2147483648
    %v673 = vxor.u32 %v671, 2147483648
    %v674 = vmul.f32 %v672, 1.442695
    %v675 = vpow.pop %v674
    %v676 = vmul.f32 %v673, 1.442695
    %v677 = vpow.pop %v676
    %v678 = vadd.f32 %v675, 1.0
    %v679 = vadd.f32 %v677, 1.0
    %v680 = vrcp.pop %v678
    %v681 = vmul.f32 1.0, %v680
    %v682 = vrcp.pop %v679
    %v683 = vmul.f32 1.0, %v682
    %v684 = vmul.f32 %v670, %v681
    %v685 = vmul.f32 %v671, %v683
    %v686 = vadd.f32 %v684, %v555
    %v687 = vadd.f32 %v685, %v556
    %v688 = vld [vmem:[#allocation7 + $0x48] sm:$0xf]
    %v689 = vld [vmem:[#allocation7 + $0x4c] sm:$0xf]
    %v690 = vld [vmem:[#allocation7 + $0x50] sm:$0xf]
    %v691 = vld [vmem:[#allocation7 + $0x54] sm:$0xf]
    %v692 = vpack.c.bf16 %v687, %v686
    %v697 = vunpack.c.l.b16 %v688
    %v698 = vunpack.c.l.b16 %v689
    %v699 = vunpack.c.l.b16 %v690
    %v700 = vunpack.c.l.b16 %v691
    %v701 = vpack.c.b16 %v698, %v697
    %v702 = vpack.c.b16 %v700, %v699
    %v706 = vsel %vm179, %v692, 0
    %708 = vmatprep.subr.bf16.mxu0 0
    %709 = vmatpush1.bf16.msra.mxu0 %v701
    %710 = vmatprep.subr.bf16.mxu0 0
    %711 = vmatpush1.bf16.msra.mxu0 %v702
    %712 = vmatprep.subr.bf16.mxu0 0
    %713 = vmatpush1.bf16.msra.mxu0 0
    %714 = vmatprep.subr.bf16.mxu0 0
    %715 = vmatpush1.bf16.msra.mxu0 0
    %716 = vmatprep.subr.bf16.mxu0 0
    %717 = vmatpush1.bf16.msra.mxu0 0
    %718 = vmatprep.subr.bf16.mxu0 0
    %719 = vmatpush1.bf16.msra.mxu0 0
    %720 = vmatprep.subr.bf16.mxu0 0
    %721 = vmatpush1.bf16.msra.mxu0 0
    %722 = vmatprep.subr.bf16.mxu0 0
    %723 = vmatpush1.bf16.msra.mxu0 0
    %724 = vmatprep.subr.bf16.mxu0 0
    %725 = vmatpush1.bf16.msra.mxu0 0
    %726 = vmatprep.subr.bf16.mxu0 0
    %727 = vmatpush1.bf16.msra.mxu0 0
    %728 = vmatprep.subr.bf16.mxu0 0
    %729 = vmatpush1.bf16.msra.mxu0 0
    %730 = vmatprep.subr.bf16.mxu0 0
    %731 = vmatpush1.bf16.msra.mxu0 0
    %732 = vmatprep.subr.bf16.mxu0 0
    %733 = vmatpush1.bf16.msra.mxu0 0
    %734 = vmatprep.subr.bf16.mxu0 0
    %735 = vmatpush1.bf16.msra.mxu0 0
    %736 = vmatprep.subr.bf16.mxu0 0
    %737 = vmatpush1.bf16.msra.mxu0 0
    %738 = vmatprep.subr.bf16.mxu0 0
    %739 = vmatpush1.bf16.msra.mxu0 0
    %740 = vmatprep.mubr.bf16.mxu0 0
    %741 = vmatmul.mubr.bf16.gmra.mrb[0].mxu0 %v706
    %v742 = vpop.f32.mrb[0].mxu0
    %v743 = vadd.f32 0.0, %v742
    %v744 = vpop.f32.mrb[0].mxu0
    %v745 = vpop.f32.mrb[0].mxu0
    %v746 = vadd.f32 0.0, %v745
    %v747 = vpop.f32.mrb[0].mxu0
    %748 = vdwg.mxu0
    %v749 = vpack.c.bf16 %v746, %v743
    %750 = vmatprep.subr.bf16.mxu0 0
    %751 = vmatpush1.bf16.msra.mxu0 %v749
    %752 = vmatprep.subr.bf16.mxu0 0
    %753 = vmatpush1.bf16.msra.mxu0 0
    %754 = vmatprep.subr.bf16.mxu0 0
    %755 = vmatpush1.bf16.msra.mxu0 0
    %756 = vmatprep.subr.bf16.mxu0 0
    %757 = vmatpush1.bf16.msra.mxu0 0
    %758 = vmatprep.subr.bf16.mxu0 0
    %759 = vmatpush1.bf16.msra.mxu0 0
    %760 = vmatprep.subr.bf16.mxu0 0
    %761 = vmatpush1.bf16.msra.mxu0 0
    %762 = vmatprep.subr.bf16.mxu0 0
    %763 = vmatpush1.bf16.msra.mxu0 0
    %764 = vmatprep.subr.bf16.mxu0 0
    %765 = vmatpush1.bf16.msra.mxu0 0
    %766 = vmatprep.subr.bf16.mxu0 0
    %767 = vmatpush1.bf16.msra.mxu0 0
    %768 = vmatprep.subr.bf16.mxu0 0
    %769 = vmatpush1.bf16.msra.mxu0 0
    %770 = vmatprep.subr.bf16.mxu0 0
    %771 = vmatpush1.bf16.msra.mxu0 0
    %772 = vmatprep.subr.bf16.mxu0 0
    %773 = vmatpush1.bf16.msra.mxu0 0
    %774 = vmatprep.subr.bf16.mxu0 0
    %775 = vmatpush1.bf16.msra.mxu0 0
    %776 = vmatprep.subr.bf16.mxu0 0
    %777 = vmatpush1.bf16.msra.mxu0 0
    %778 = vmatprep.subr.bf16.mxu0 0
    %779 = vmatpush1.bf16.msra.mxu0 0
    %780 = vmatprep.subr.bf16.mxu0 0
    %781 = vmatpush1.bf16.msra.mxu0 0
    %782 = vmatprep.mubr.bf16.mxu0 0
    %783 = vmatmul.mubr.bf16.gmra.mrb[0].mxu0 %v226
    %v784 = vpop.f32.mrb[0].mxu0
    %v785 = vadd.f32 0.0, %v784
    %v786 = vpop.f32.mrb[0].mxu0
    %v787 = vpop.f32.mrb[0].mxu0
    %v788 = vadd.f32 0.0, %v787
    %v789 = vpop.f32.mrb[0].mxu0
    %790 = vdwg.mxu0
    %v791 = vlaneseq
    %v792 = vshrl.u32 %v791, 7
    %v793 = vsub.s32 6, %v792
    %v794 = vrot.slane %v79, %v793
    %v795 = vmul.f32 %v785, %v794
    %v796 = vmul.f32 %v788, %v794
    %v797 = vlaneseq
    %v798 = vshrl.u32 %v797, 7
    %v799 = vsub.s32 4, %v798
    %v800 = vrot.slane %v80, %v799
    %v801 = vadd.f32 %v795, %v800
    %v802 = vadd.f32 %v796, %v800
    %v803 = vxor.u32 %v801, 2147483648
    %v804 = vxor.u32 %v802, 2147483648
    %v805 = vmul.f32 %v803, 1.442695
    %v806 = vpow.pop %v805
    %v807 = vmul.f32 %v804, 1.442695
    %v808 = vpow.pop %v807
    %v809 = vadd.f32 %v806, 1.0
    %v810 = vadd.f32 %v808, 1.0
    %v811 = vrcp.pop %v809
    %v812 = vmul.f32 1.0, %v811
    %v813 = vrcp.pop %v810
    %v814 = vmul.f32 1.0, %v813
    %v815 = vmul.f32 %v801, %v812
    %v816 = vmul.f32 %v802, %v814
    %v817 = vadd.f32 %v815, %v686
    %v818 = vadd.f32 %v816, %v687
    %v819 = vld [vmem:[#allocation7 + $0x58] sm:$0xf]
    %v820 = vld [vmem:[#allocation7 + $0x5c] sm:$0xf]
    %v821 = vld [vmem:[#allocation7 + $0x60] sm:$0xf]
    %v822 = vld [vmem:[#allocation7 + $0x64] sm:$0xf]
    %v823 = vpack.c.bf16 %v818, %v817
    %v828 = vunpack.c.l.b16 %v819
    %v829 = vunpack.c.l.b16 %v820
    %v830 = vunpack.c.l.b16 %v821
    %v831 = vunpack.c.l.b16 %v822
    %v832 = vpack.c.b16 %v829, %v828
    %v833 = vpack.c.b16 %v831, %v830
    %v837 = vsel %vm179, %v823, 0
    %839 = vmatprep.subr.bf16.mxu0 0
    %840 = vmatpush1.bf16.msra.mxu0 %v832
    %841 = vmatprep.subr.bf16.mxu0 0
    %842 = vmatpush1.bf16.msra.mxu0 %v833
    %843 = vmatprep.subr.bf16.mxu0 0
    %844 = vmatpush1.bf16.msra.mxu0 0
    %845 = vmatprep.subr.bf16.mxu0 0
    %846 = vmatpush1.bf16.msra.mxu0 0
    %847 = vmatprep.subr.bf16.mxu0 0
    %848 = vmatpush1.bf16.msra.mxu0 0
    %849 = vmatprep.subr.bf16.mxu0 0
    %850 = vmatpush1.bf16.msra.mxu0 0
    %851 = vmatprep.subr.bf16.mxu0 0
    %852 = vmatpush1.bf16.msra.mxu0 0
    %853 = vmatprep.subr.bf16.mxu0 0
    %854 = vmatpush1.bf16.msra.mxu0 0
    %855 = vmatprep.subr.bf16.mxu0 0
    %856 = vmatpush1.bf16.msra.mxu0 0
    %857 = vmatprep.subr.bf16.mxu0 0
    %858 = vmatpush1.bf16.msra.mxu0 0
    %859 = vmatprep.subr.bf16.mxu0 0
    %860 = vmatpush1.bf16.msra.mxu0 0
    %861 = vmatprep.subr.bf16.mxu0 0
    %862 = vmatpush1.bf16.msra.mxu0 0
    %863 = vmatprep.subr.bf16.mxu0 0
    %864 = vmatpush1.bf16.msra.mxu0 0
    %865 = vmatprep.subr.bf16.mxu0 0
    %866 = vmatpush1.bf16.msra.mxu0 0
    %867 = vmatprep.subr.bf16.mxu0 0
    %868 = vmatpush1.bf16.msra.mxu0 0
    %869 = vmatprep.subr.bf16.mxu0 0
    %870 = vmatpush1.bf16.msra.mxu0 0
    %871 = vmatprep.mubr.bf16.mxu0 0
    %872 = vmatmul.mubr.bf16.gmra.mrb[0].mxu0 %v837
    %v873 = vpop.f32.mrb[0].mxu0
    %v874 = vadd.f32 0.0, %v873
    %v875 = vpop.f32.mrb[0].mxu0
    %v876 = vpop.f32.mrb[0].mxu0
    %v877 = vadd.f32 0.0, %v876
    %v878 = vpop.f32.mrb[0].mxu0
    %879 = vdwg.mxu0
    %v880 = vpack.c.bf16 %v877, %v874
    %881 = vmatprep.subr.bf16.mxu0 0
    %882 = vmatpush1.bf16.msra.mxu0 %v880
    %883 = vmatprep.subr.bf16.mxu0 0
    %884 = vmatpush1.bf16.msra.mxu0 0
    %885 = vmatprep.subr.bf16.mxu0 0
    %886 = vmatpush1.bf16.msra.mxu0 0
    %887 = vmatprep.subr.bf16.mxu0 0
    %888 = vmatpush1.bf16.msra.mxu0 0
    %889 = vmatprep.subr.bf16.mxu0 0
    %890 = vmatpush1.bf16.msra.mxu0 0
    %891 = vmatprep.subr.bf16.mxu0 0
    %892 = vmatpush1.bf16.msra.mxu0 0
    %893 = vmatprep.subr.bf16.mxu0 0
    %894 = vmatpush1.bf16.msra.mxu0 0
    %895 = vmatprep.subr.bf16.mxu0 0
    %896 = vmatpush1.bf16.msra.mxu0 0
    %897 = vmatprep.subr.bf16.mxu0 0
    %898 = vmatpush1.bf16.msra.mxu0 0
    %899 = vmatprep.subr.bf16.mxu0 0
    %900 = vmatpush1.bf16.msra.mxu0 0
    %901 = vmatprep.subr.bf16.mxu0 0
    %902 = vmatpush1.bf16.msra.mxu0 0
    %903 = vmatprep.subr.bf16.mxu0 0
    %904 = vmatpush1.bf16.msra.mxu0 0
    %905 = vmatprep.subr.bf16.mxu0 0
    %906 = vmatpush1.bf16.msra.mxu0 0
    %907 = vmatprep.subr.bf16.mxu0 0
    %908 = vmatpush1.bf16.msra.mxu0 0
    %909 = vmatprep.subr.bf16.mxu0 0
    %910 = vmatpush1.bf16.msra.mxu0 0
    %911 = vmatprep.subr.bf16.mxu0 0
    %912 = vmatpush1.bf16.msra.mxu0 0
    %913 = vmatprep.mubr.bf16.mxu0 0
    %914 = vmatmul.mubr.bf16.gmra.mrb[0].mxu0 %v226
    %v915 = vpop.f32.mrb[0].mxu0
    %v916 = vadd.f32 0.0, %v915
    %v917 = vpop.f32.mrb[0].mxu0
    %v918 = vpop.f32.mrb[0].mxu0
    %v919 = vadd.f32 0.0, %v918
    %v920 = vpop.f32.mrb[0].mxu0
    %921 = vdwg.mxu0
    %v922 = vlaneseq
    %v923 = vshrl.u32 %v922, 7
    %v924 = vsub.s32 7, %v923
    %v925 = vrot.slane %v79, %v924
    %v926 = vmul.f32 %v916, %v925
    %v927 = vmul.f32 %v919, %v925
    %v928 = vlaneseq
    %v929 = vshrl.u32 %v928, 7
    %v930 = vsub.s32 5, %v929
    %v931 = vrot.slane %v80, %v930
    %v932 = vadd.f32 %v926, %v931
    %v933 = vadd.f32 %v927, %v931
    %v934 = vxor.u32 %v932, 2147483648
    %v935 = vxor.u32 %v933, 2147483648
    %v936 = vmul.f32 %v934, 1.442695
    %v937 = vpow.pop %v936
    %v938 = vmul.f32 %v935, 1.442695
    %v939 = vpow.pop %v938
    %v940 = vadd.f32 %v937, 1.0
    %v941 = vadd.f32 %v939, 1.0
    %v942 = vrcp.pop %v940
    %v943 = vmul.f32 1.0, %v942
    %v944 = vrcp.pop %v941
    %v945 = vmul.f32 1.0, %v944
    %v946 = vmul.f32 %v932, %v943
    %v947 = vmul.f32 %v933, %v945
    %v948 = vadd.f32 %v946, %v817
    %v949 = vadd.f32 %v947, %v818
    %v950 = vld [vmem:[#allocation7 + $0x68] sm:$0xf]
    %v951 = vld [vmem:[#allocation7 + $0x6c] sm:$0xf]
    %v952 = vld [vmem:[#allocation7 + $0x70] sm:$0xf]
    %v953 = vld [vmem:[#allocation7 + $0x74] sm:$0xf]
    %v954 = vpack.c.bf16 %v949, %v948
    %v959 = vunpack.c.l.b16 %v950
    %v960 = vunpack.c.l.b16 %v951
    %v961 = vunpack.c.l.b16 %v952
    %v962 = vunpack.c.l.b16 %v953
    %v963 = vpack.c.b16 %v960, %v959
    %v964 = vpack.c.b16 %v962, %v961
    %v968 = vsel %vm179, %v954, 0
    %970 = vmatprep.subr.bf16.mxu0 0
    %971 = vmatpush1.bf16.msra.mxu0 %v963
    %972 = vmatprep.subr.bf16.mxu0 0
    %973 = vmatpush1.bf16.msra.mxu0 %v964
    %974 = vmatprep.subr.bf16.mxu0 0
    %975 = vmatpush1.bf16.msra.mxu0 0
    %976 = vmatprep.subr.bf16.mxu0 0
    %977 = vmatpush1.bf16.msra.mxu0 0
    %978 = vmatprep.subr.bf16.mxu0 0
    %979 = vmatpush1.bf16.msra.mxu0 0
    %980 = vmatprep.subr.bf16.mxu0 0
    %981 = vmatpush1.bf16.msra.mxu0 0
    %982 = vmatprep.subr.bf16.mxu0 0
    %983 = vmatpush1.bf16.msra.mxu0 0
    %984 = vmatprep.subr.bf16.mxu0 0
    %985 = vmatpush1.bf16.msra.mxu0 0
    %986 = vmatprep.subr.bf16.mxu0 0
    %987 = vmatpush1.bf16.msra.mxu0 0
    %988 = vmatprep.subr.bf16.mxu0 0
    %989 = vmatpush1.bf16.msra.mxu0 0
    %990 = vmatprep.subr.bf16.mxu0 0
    %991 = vmatpush1.bf16.msra.mxu0 0
    %992 = vmatprep.subr.bf16.mxu0 0
    %993 = vmatpush1.bf16.msra.mxu0 0
    %994 = vmatprep.subr.bf16.mxu0 0
    %995 = vmatpush1.bf16.msra.mxu0 0
    %996 = vmatprep.subr.bf16.mxu0 0
    %997 = vmatpush1.bf16.msra.mxu0 0
    %998 = vmatprep.subr.bf16.mxu0 0
    %999 = vmatpush1.bf16.msra.mxu0 0
    %1000 = vmatprep.subr.bf16.mxu0 0
    %1001 = vmatpush1.bf16.msra.mxu0 0
    %1002 = vmatprep.mubr.bf16.mxu0 0
    %1003 = vmatmul.mubr.bf16.gmra.mrb[0].mxu0 %v968
    %v1004 = vpop.f32.mrb[0].mxu0
    %v1005 = vadd.f32 0.0, %v1004
    %v1006 = vpop.f32.mrb[0].mxu0
    %v1007 = vpop.f32.mrb[0].mxu0
    %v1008 = vadd.f32 0.0, %v1007
    %v1009 = vpop.f32.mrb[0].mxu0
    %1010 = vdwg.mxu0
    %v1011 = vlaneseq
    %v1012 = vshrl.u32 %v1011, 7
    %v1013 = vsub.s32 6, %v1012
    %v1014 = vrot.slane %v80, %v1013
    %v1015 = vmul.f32 %v1005, %v1014
    %v1016 = vmul.f32 %v1008, %v1014
    %v1017 = vlaneseq
    %v1018 = vshrl.u32 %v1017, 7
    %v1019 = vsub.s32 7, %v1018
    %v1020 = vrot.slane %v80, %v1019
    %v1021 = vadd.f32 %v1015, %v1020
    %v1022 = vadd.f32 %v1016, %v1020
    %v1023 = vxor.u32 %v1021, 2147483648
    %v1024 = vxor.u32 %v1022, 2147483648
    %v1025 = vmul.f32 %v1023, 1.442695
    %v1026 = vpow.pop %v1025
    %v1027 = vmul.f32 %v1024, 1.442695
    %v1028 = vpow.pop %v1027
    %v1029 = vadd.f32 %v1026, 1.0
    %v1030 = vadd.f32 %v1028, 1.0
    %v1031 = vrcp.pop %v1029
    %v1032 = vmul.f32 1.0, %v1031
    %v1033 = vrcp.pop %v1030
    %v1034 = vmul.f32 1.0, %v1033
    %v1035 = vmul.f32 %v1021, %v1032
    %v1036 = vmul.f32 %v1022, %v1034
    %v1037 = vld [vmem:[#allocation7 + $0x78] sm:$0xf]
    %v1038 = vld [vmem:[#allocation7 + $0x7c] sm:$0xf]
    %v1039 = vld [vmem:[#allocation7 + $0x80] sm:$0xf]
    %v1040 = vld [vmem:[#allocation7 + $0x84] sm:$0xf]
    %v1041 = vld [vmem:[#allocation7 + $0x88] sm:$0xf]
    %v1042 = vld [vmem:[#allocation7 + $0x8c] sm:$0xf]
    %v1043 = vld [vmem:[#allocation7 + $0x90] sm:$0xf]
    %v1044 = vld [vmem:[#allocation7 + $0x94] sm:$0xf]
    %v1045 = vld [vmem:[#allocation7 + $0x98] sm:$0xf]
    %v1046 = vld [vmem:[#allocation7 + $0x9c] sm:$0xf]
    %v1047 = vld [vmem:[#allocation7 + $0xa0] sm:$0xf]
    %v1048 = vld [vmem:[#allocation7 + $0xa4] sm:$0xf]
    %v1049 = vld [vmem:[#allocation7 + $0xa8] sm:$0xf]
    %v1050 = vld [vmem:[#allocation7 + $0xac] sm:$0xf]
    %v1051 = vld [vmem:[#allocation7 + $0xb0] sm:$0xf]
    %v1052 = vld [vmem:[#allocation7 + $0xb4] sm:$0xf]
    %v1053 = vpack.c.bf16 %v1036, %v1035
    %v1070 = vunpack.c.l.b16 %v1037
    %v1071 = vunpack.c.l.b16 %v1038
    %v1072 = vunpack.c.l.b16 %v1039
    %v1073 = vunpack.c.l.b16 %v1040
    %v1074 = vunpack.c.l.b16 %v1041
    %v1075 = vunpack.c.l.b16 %v1042
    %v1076 = vunpack.c.l.b16 %v1043
    %v1077 = vunpack.c.l.b16 %v1044
    %v1078 = vunpack.c.l.b16 %v1045
    %v1079 = vunpack.c.l.b16 %v1046
    %v1080 = vunpack.c.l.b16 %v1047
    %v1081 = vunpack.c.l.b16 %v1048
    %v1082 = vunpack.c.l.b16 %v1049
    %v1083 = vunpack.c.l.b16 %v1050
    %v1084 = vunpack.c.l.b16 %v1051
    %v1085 = vunpack.c.l.b16 %v1052
    %v1086 = vpack.c.b16 %v1071, %v1070
    %v1087 = vpack.c.b16 %v1073, %v1072
    %v1088 = vpack.c.b16 %v1075, %v1074
    %v1089 = vpack.c.b16 %v1077, %v1076
    %v1090 = vpack.c.b16 %v1079, %v1078
    %v1091 = vpack.c.b16 %v1081, %v1080
    %v1092 = vpack.c.b16 %v1083, %v1082
    %v1093 = vpack.c.b16 %v1085, %v1084
    %1102 = vmatprep.subr.bf16.mxu0 0
    %1103 = vmatpush1.bf16.msra.mxu0 %v1086
    %1104 = vmatprep.subr.bf16.mxu0 0
    %1105 = vmatpush1.bf16.msra.mxu0 %v1087
    %1106 = vmatprep.subr.bf16.mxu0 0
    %1107 = vmatpush1.bf16.msra.mxu0 %v1088
    %1108 = vmatprep.subr.bf16.mxu0 0
    %1109 = vmatpush1.bf16.msra.mxu0 %v1089
    %1110 = vmatprep.subr.bf16.mxu0 0
    %1111 = vmatpush1.bf16.msra.mxu0 %v1090
    %1112 = vmatprep.subr.bf16.mxu0 0
    %1113 = vmatpush1.bf16.msra.mxu0 %v1091
    %1114 = vmatprep.subr.bf16.mxu0 0
    %1115 = vmatpush1.bf16.msra.mxu0 %v1092
    %1116 = vmatprep.subr.bf16.mxu0 0
    %1117 = vmatpush1.bf16.msra.mxu0 %v1093
    %1118 = vmatprep.subr.bf16.mxu0 0
    %1119 = vmatpush1.bf16.msra.mxu0 0
    %1120 = vmatprep.subr.bf16.mxu0 0
    %1121 = vmatpush1.bf16.msra.mxu0 0
    %1122 = vmatprep.subr.bf16.mxu0 0
    %1123 = vmatpush1.bf16.msra.mxu0 0
    %1124 = vmatprep.subr.bf16.mxu0 0
    %1125 = vmatpush1.bf16.msra.mxu0 0
    %1126 = vmatprep.subr.bf16.mxu0 0
    %1127 = vmatpush1.bf16.msra.mxu0 0
    %1128 = vmatprep.subr.bf16.mxu0 0
    %1129 = vmatpush1.bf16.msra.mxu0 0
    %1130 = vmatprep.subr.bf16.mxu0 0
    %1131 = vmatpush1.bf16.msra.mxu0 0
    %1132 = vmatprep.subr.bf16.mxu0 0
    %1133 = vmatpush1.bf16.msra.mxu0 0
    %1134 = vmatprep.mubr.bf16.mxu0 0
    %1135 = vmatmul.mubr.bf16.gmra.mrb[0].mxu0 %v1053
    %v1136 = vpop.f32.mrb[0].mxu0
    %v1137 = vadd.f32 0.0, %v1136
    %v1138 = vpop.f32.mrb[0].mxu0
    %v1139 = vpop.f32.mrb[0].mxu0
    %v1140 = vadd.f32 0.0, %v1139
    %v1141 = vpop.f32.mrb[0].mxu0
    %1142 = vdwg.mxu0
    %v1143 = vlaneseq
    %v1144 = vshrl.u32 %v1143, 7
    %v1145 = vsub.s32 0, %v1144
    %v1146 = vrot.slane %v81, %v1145
    %v1147 = vmul.f32 %v1137, %v1146
    %v1148 = vmul.f32 %v1140, %v1146
    %v1149 = vlaneseq
    %v1150 = vshrl.u32 %v1149, 7
    %v1151 = vsub.s32 1, %v1150
    %v1152 = vrot.slane %v81, %v1151
    %v1153 = vadd.f32 %v1147, %v1152
    %v1154 = vadd.f32 %v1148, %v1152
    %v1155 = vxor.u32 %v1153, 2147483648
    %v1156 = vxor.u32 %v1154, 2147483648
    %v1157 = vmul.f32 %v1155, 1.442695
    %v1158 = vpow.pop %v1157
    %v1159 = vmul.f32 %v1156, 1.442695
    %v1160 = vpow.pop %v1159
    %v1161 = vadd.f32 %v1158, 1.0
    %v1162 = vadd.f32 %v1160, 1.0
    %v1163 = vrcp.pop %v1161
    %v1164 = vmul.f32 1.0, %v1163
    %v1165 = vrcp.pop %v1162
    %v1166 = vmul.f32 1.0, %v1165
    %v1167 = vmul.f32 %v1153, %v1164
    %v1168 = vmul.f32 %v1154, %v1166
    %v1169 = vld [vmem:[#allocation7 + $0xb8] sm:$0xf]
    %v1170 = vld [vmem:[#allocation7 + $0xbc] sm:$0xf]
    %v1171 = vld [vmem:[#allocation7 + $0xc0] sm:$0xf]
    %v1172 = vld [vmem:[#allocation7 + $0xc4] sm:$0xf]
    %v1173 = vld [vmem:[#allocation7 + $0xc8] sm:$0xf]
    %v1174 = vld [vmem:[#allocation7 + $0xcc] sm:$0xf]
    %v1175 = vld [vmem:[#allocation7 + $0xd0] sm:$0xf]
    %v1176 = vld [vmem:[#allocation7 + $0xd4] sm:$0xf]
    %v1177 = vpack.c.bf16 %v1168, %v1167
    %v1178 = vlaneseq
    %v1179 = vshrl.u32 %v1178, 7
    %v1180 = vsub.s32 2, %v1179
    %v1181 = vrot.slane %v81, %v1180
    %v1190 = vunpack.c.l.b16 %v1169
    %v1191 = vunpack.c.l.b16 %v1170
    %v1192 = vunpack.c.l.b16 %v1171
    %v1193 = vunpack.c.l.b16 %v1172
    %v1194 = vunpack.c.l.b16 %v1173
    %v1195 = vunpack.c.l.b16 %v1174
    %v1196 = vunpack.c.l.b16 %v1175
    %v1197 = vunpack.c.l.b16 %v1176
    %v1198 = vpack.c.b16 %v1191, %v1190
    %v1199 = vpack.c.b16 %v1193, %v1192
    %v1200 = vpack.c.b16 %v1195, %v1194
    %v1201 = vpack.c.b16 %v1197, %v1196
    %vm1206 = vcmask 523264
    %v1208 = vsel %vm1206, %v1177, 0
    %1210 = vmatprep.subr.bf16.mxu0 0
    %1211 = vmatpush1.bf16.msra.mxu0 %v1198
    %1212 = vmatprep.subr.bf16.mxu0 0
    %1213 = vmatpush1.bf16.msra.mxu0 %v1199
    %1214 = vmatprep.subr.bf16.mxu0 0
    %1215 = vmatpush1.bf16.msra.mxu0 %v1200
    %1216 = vmatprep.subr.bf16.mxu0 0
    %1217 = vmatpush1.bf16.msra.mxu0 %v1201
    %1218 = vmatprep.subr.bf16.mxu0 0
    %1219 = vmatpush1.bf16.msra.mxu0 0
    %1220 = vmatprep.subr.bf16.mxu0 0
    %1221 = vmatpush1.bf16.msra.mxu0 0
    %1222 = vmatprep.subr.bf16.mxu0 0
    %1223 = vmatpush1.bf16.msra.mxu0 0
    %1224 = vmatprep.subr.bf16.mxu0 0
    %1225 = vmatpush1.bf16.msra.mxu0 0
    %1226 = vmatprep.subr.bf16.mxu0 0
    %1227 = vmatpush1.bf16.msra.mxu0 0
    %1228 = vmatprep.subr.bf16.mxu0 0
    %1229 = vmatpush1.bf16.msra.mxu0 0
    %1230 = vmatprep.subr.bf16.mxu0 0
    %1231 = vmatpush1.bf16.msra.mxu0 0
    %1232 = vmatprep.subr.bf16.mxu0 0
    %1233 = vmatpush1.bf16.msra.mxu0 0
    %1234 = vmatprep.subr.bf16.mxu0 0
    %1235 = vmatpush1.bf16.msra.mxu0 0
    %1236 = vmatprep.subr.bf16.mxu0 0
    %1237 = vmatpush1.bf16.msra.mxu0 0
    %1238 = vmatprep.subr.bf16.mxu0 0
    %1239 = vmatpush1.bf16.msra.mxu0 0
    %1240 = vmatprep.subr.bf16.mxu0 0
    %1241 = vmatpush1.bf16.msra.mxu0 0
    %1242 = vmatprep.mubr.bf16.mxu0 0
    %1243 = vmatmul.mubr.bf16.gmra.mrb[0].mxu0 %v1208
    %v1244 = vpop.f32.mrb[0].mxu0
    %v1245 = vadd.f32 %v1181, %v1244
    %v1246 = vpop.f32.mrb[0].mxu0
    %v1247 = vpop.f32.mrb[0].mxu0
    %v1248 = vadd.f32 %v1181, %v1247
    %v1249 = vpop.f32.mrb[0].mxu0
    %1250 = vdwg.mxu0
    %1251 = vst [vmem:[#allocation10] sm:$0xff] %v1245
    %1252 = vst [vmem:[#allocation10 + $0x8] sm:$0xff] %v1248
    // Predicated region
    $region34: #{tpu_custom_call.1} parent=1 // pred_check
      _
    $region35: #{tpu_custom_call.1} parent=1 // pred_check_branch
      %1254 = sbr.rel (0) target = $region37
    $region36: #{tpu_custom_call.1} parent=1 // pred_region
      %s1256 = ssub.s32 256, 256
      %1257 = vsyncadd [#allocation4], %s1256
      %s1258 = sshll.u32 [#allocation10], 4
      %s1259 = int_to_ptr.vmem [resolvable:$true] %s1258
      %1264 = dma.vmem_to_hbm [thread:$0]  %s1259, 256, %s4, [#allocation4], 128, 128, 8
    $region37: #{tpu_custom_call.1} parent=1 // pred_fallthru
      _
    // Predicated region
    $region38: #{tpu_custom_call.1} parent=1 // pred_check
      _
    $region39: #{tpu_custom_call.1} parent=1 // pred_check_branch
      %1266 = sbr.rel (0) target = $region41
    $region40: #{tpu_custom_call.1} parent=1 // pred_region
      %1267 = dma.done [#allocation4], 256
    $region41: #{tpu_custom_call.1} parent=1 // pred_fallthru
      _
    %1268 = vsyncpa [#allocation3], 1
    %1269 = vsyncpa [#allocation6], 1
    %1270 = vsyncpa [#allocation9], 1
    %1271 = vsyncpa [#allocation4], 1

</llo_original>
